<compile_context>
chip_gen: v7x
topology: tpu7x:2x2x1
jax: 0.10.0
libtpu: 0.0.40
codegen_flags: <defaults>
</compile_context>

<pallas_src>
import jax
import jax.numpy as jnp
from jax.experimental import pallas as pl
from jax.experimental.pallas import tpu as pltpu


def _round_up(x, m):
    return ((x + m - 1) // m) * m


def _choose_tile_v(H_pad, V, max_tile_bytes):
    """Biggest lane-aligned vocab tile whose bf16 weight tile fits max_tile_bytes,
    so each grid step is HBM-bound, not per-step-overhead-bound."""
    v128 = _round_up(V, 128)
    max_cols = max(128, ((max_tile_bytes // (2 * H_pad)) // 128) * 128)
    tile_v = min(v128, max_cols)
    v_pad = _round_up(v128, tile_v)
    return tile_v, v_pad


def _vmem_limit_bytes(B_pad, H_pad, tile_v):
    """Scoped-VMEM request computed from actual buffer sizes (+ headroom)."""
    f32, bf16 = 4, 2
    dbl = 2  # BlockSpec pipelining double-buffers each operand block
    blocks = (2 * B_pad * H_pad * f32                 # h0, c0
              + (2 * H_pad) * (4 * H_pad) * bf16      # stacked LSTM weight
              + (4 * H_pad) * f32                     # combined LSTM bias
              + H_pad * tile_v * bf16                 # fc weight tile
              + tile_v * f32                          # fc bias tile
              + B_pad * tile_v * f32                  # z tile
              + 2 * B_pad * H_pad * f32)              # h_out, c_out
    scratch = (B_pad * H_pad * f32                    # gathered x rows
               + B_pad * 2 * H_pad * bf16             # [x, h0] concat
               + B_pad * H_pad * bf16)                # h in bf16 for fc
    return max(dbl * blocks + scratch + (4 << 20), 16 << 20)


# ---------------------------------------------------------------------------
# Fused kernel: embedding row gather + single-step LSTM (j == 0) + fc vocab tile
# ---------------------------------------------------------------------------
def _make_decoder_kernel(B, B_pad, H_pad):
    def decoder_kernel(idx_ref,               # SMEM (B_pad,) int32 (scalar prefetch)
                       emb_hbm,               # HBM  (V, H_pad) f32 (pl.ANY)
                       h0_ref, c0_ref,        # VMEM (B_pad, H_pad) f32
                       w_cat_ref,             # VMEM (2H_pad, 4H_pad) bf16 [W_ih^T; W_hh^T]
                       b_ref,                 # VMEM (1, 4H_pad) f32   b_ih + b_hh
                       w_fc_ref,              # VMEM (H_pad, TILE_V) bf16 (vocab tile j)
                       bfc_ref,               # VMEM (1, TILE_V) f32      (vocab tile j)
                       z_ref,                 # VMEM (B_pad, TILE_V) f32  (vocab tile j)
                       h_out_ref, c_out_ref,  # VMEM (B_pad, H_pad) f32 (grid-resident)
                       x_buf, xh_buf, h_bf, dma_sems):
        # ---- phase 1 (first vocab tile only): gather + fused-gate LSTM step ----
        @pl.when(pl.program_id(0) == 0)
        def _():
            # row gather: only the B real rows, all DMAs in flight at once
            copies = []
            for b in range(B):  # B is small & static -> unrolled
                cp = pltpu.make_async_copy(emb_hbm.at[pl.ds(idx_ref[b], 1)],
                                           x_buf.at[pl.ds(b, 1)],
                                           dma_sems.at[b])
                cp.start()
                copies.append(cp)
            # padded batch rows are never DMA'd; zero them so scratch holds no garbage
            # (they are sliced off in the wrapper and never feed real rows anyway)
            if B < B_pad:
                x_buf[B:B_pad, :] = jnp.zeros((B_pad - B, H_pad), jnp.float32)
            for cp in copies:
                cp.wait()

            # dropout(p=0.1) on embeddings -> identity (inference mode)

            # fused gate matmul: [x, h0] @ [W_ih^T ; W_hh^T]  (single MXU call)
            xh_buf[:, 0:H_pad] = x_buf[...].astype(jnp.bfloat16)
            xh_buf[:, H_pad:2 * H_pad] = h0_ref[...].astype(jnp.bfloat16)
            gates = jnp.dot(xh_buf[...], w_cat_ref[...],
                            preferred_element_type=jnp.float32) + b_ref[...]  # (B,4H)

            # PyTorch gate order i, f, g, o ; H_pad multiple of 128 -> lane-aligned
            i_g = jax.nn.sigmoid(gates[:, 0:H_pad])
            f_g = jax.nn.sigmoid(gates[:, H_pad:2 * H_pad])
            g_g = jnp.tanh(gates[:, 2 * H_pad:3 * H_pad])
            o_g = jax.nn.sigmoid(gates[:, 3 * H_pad:4 * H_pad])

            c_new = f_g * c0_ref[...] + i_g * g_g
            h_new = o_g * jnp.tanh(c_new)
            c_out_ref[...] = c_new
            h_out_ref[...] = h_new
            # cast h exactly once; every fc vocab tile reuses it from scratch
            h_bf[...] = h_new.astype(jnp.bfloat16)

        # ---- phase 2 (every vocab tile): z_tile = h @ W_fc_tile + b_fc_tile ----
        z_ref[...] = (jnp.dot(h_bf[...], w_fc_ref[...],
                              preferred_element_type=jnp.float32) + bfc_ref[...])

    return decoder_kernel


# ---------------------------------------------------------------------------
# Parameter preparation (padding + layout + dtype), done once.
# ---------------------------------------------------------------------------
def prepare_decoder_params(emb, w_ih, w_hh, b_ih, b_hh, w_fc, b_fc,
                           *, max_fc_tile_bytes=4 << 20):
    V, H = emb.shape
    assert w_ih.shape == (4 * H, H), "module requires input_size == hidden_size"
    H_pad = _round_up(H, 128)
    TILE_V, V_pad = _choose_tile_v(H_pad, V, max_fc_tile_bytes)

    # Embedding table: pad feature dim only; stays in HBM, gathered row-by-row.
    emb_p = jnp.zeros((V, H_pad), jnp.float32).at[:, :H].set(emb.astype(jnp.float32))

    # LSTM weights (PyTorch (4H, H), gate order i,f,g,o): pad each gate block to
    # H_pad, transpose, stack [W_ih^T ; W_hh^T] into one (2H_pad, 4H_pad) bf16.
    def pad_gates_t(w):
        w4 = w.reshape(4, H, H)                                    # (4, out, in)
        w4p = jnp.zeros((4, H_pad, H_pad), w.dtype).at[:, :H, :H].set(w4)
        return w4p.transpose(2, 0, 1).reshape(H_pad, 4 * H_pad)    # (in, 4*out)

    w_cat = jnp.concatenate([pad_gates_t(w_ih), pad_gates_t(w_hh)],
                            axis=0).astype(jnp.bfloat16)           # (2H_pad, 4H_pad)

    def pad_gate_bias(b):
        b4 = b.reshape(4, H)
        return jnp.zeros((4, H_pad), b.dtype).at[:, :H].set(b4).reshape(4 * H_pad)

    b_comb = (pad_gate_bias(b_ih) + pad_gate_bias(b_hh)
              ).reshape(1, 4 * H_pad).astype(jnp.float32)

    # fc: (V, H) -> padded transposed (H_pad, V_pad) bf16, bias (1, V_pad) f32.
    w_fc_t = jnp.zeros((H_pad, V_pad), jnp.bfloat16).at[:H, :V].set(
        w_fc.T.astype(jnp.bfloat16))
    b_fc_p = jnp.zeros((1, V_pad), jnp.float32).at[0, :V].set(b_fc.astype(jnp.float32))

    return dict(emb=emb_p, w_cat=w_cat, b_comb=b_comb, w_fc_t=w_fc_t, b_fc=b_fc_p,
                V=V, H=H, V_pad=V_pad, H_pad=H_pad, tile_v=TILE_V)


# ---------------------------------------------------------------------------
# Forward wrapper (PyTorch calling convention) — a single fused pallas_call.
# ---------------------------------------------------------------------------
def decoder_forward(input_indexes, hidden_state, cell_state, params):
    """input_indexes: (B,) int; hidden/cell: (1, B, H).  Returns z, hidden, cell."""
    B = input_indexes.shape[0]
    H, V = params["H"], params["V"]
    H_pad, V_pad, TILE_V = params["H_pad"], params["V_pad"], params["tile_v"]
    B_pad = _round_up(max(B, 8), 8)

    idx = jnp.zeros((B_pad,), jnp.int32).at[:B].set(input_indexes.astype(jnp.int32))
    h0 = jnp.zeros((B_pad, H_pad), jnp.float32).at[:B, :H].set(
        hidden_state.reshape(B, H).astype(jnp.float32))
    c0 = jnp.zeros((B_pad, H_pad), jnp.float32).at[:B, :H].set(
        cell_state.reshape(B, H).astype(jnp.float32))

    num_tiles = V_pad // TILE_V
    kernel = _make_decoder_kernel(B, B_pad, H_pad)

    z_pad, h_new, c_new = pl.pallas_call(
        kernel,
        out_shape=(jax.ShapeDtypeStruct((B_pad, V_pad), jnp.float32),
                   jax.ShapeDtypeStruct((B_pad, H_pad), jnp.float32),
                   jax.ShapeDtypeStruct((B_pad, H_pad), jnp.float32)),
        grid_spec=pltpu.PrefetchScalarGridSpec(
            num_scalar_prefetch=1,
            grid=(num_tiles,),
            in_specs=[
                pl.BlockSpec(memory_space=pl.ANY),                            # emb (HBM)
                pl.BlockSpec((B_pad, H_pad), lambda j, idx: (0, 0)),          # h0
                pl.BlockSpec((B_pad, H_pad), lambda j, idx: (0, 0)),          # c0
                pl.BlockSpec((2 * H_pad, 4 * H_pad), lambda j, idx: (0, 0)),  # w_cat
                pl.BlockSpec((1, 4 * H_pad), lambda j, idx: (0, 0)),          # b_comb
                pl.BlockSpec((H_pad, TILE_V), lambda j, idx: (0, j)),         # fc W tile
                pl.BlockSpec((1, TILE_V), lambda j, idx: (0, j)),             # fc b tile
            ],
            out_specs=(pl.BlockSpec((B_pad, TILE_V), lambda j, idx: (0, j)),  # z
                       pl.BlockSpec((B_pad, H_pad), lambda j, idx: (0, 0)),   # h_out
                       pl.BlockSpec((B_pad, H_pad), lambda j, idx: (0, 0))),  # c_out
            scratch_shapes=[
                pltpu.VMEM((B_pad, H_pad), jnp.float32),        # gathered x rows
                pltpu.VMEM((B_pad, 2 * H_pad), jnp.bfloat16),   # [x, h0] concat
                pltpu.VMEM((B_pad, H_pad), jnp.bfloat16),       # h (bf16) for fc
                pltpu.SemaphoreType.DMA((B,)),
            ]),
        compiler_params=pltpu.CompilerParams(
            # j==0 work must run before the fc tiles -> sequential grid axis
            dimension_semantics=("arbitrary",),
            vmem_limit_bytes=_vmem_limit_bytes(B_pad, H_pad, TILE_V)),
    )(idx, params["emb"], h0, c0, params["w_cat"], params["b_comb"],
      params["w_fc_t"], params["b_fc"])

    z = z_pad[:B, :V]
    h = h_new[:B, :H].reshape(1, B, H)
    c = c_new[:B, :H].reshape(1, B, H)
    return z, h, c


if __name__ == "__main__":
    # Module requires input_size == hidden_size (embedding output feeds the LSTM).
    B, V, H = 4, 1000, 32
    key = jax.random.PRNGKey(0)
    ks = jax.random.split(key, 10)

    # deterministic synthetic parameters (PyTorch native shapes)
    emb = jax.random.normal(ks[0], (V, H), jnp.float32) * 0.1       # Embedding.weight
    w_ih = jax.random.normal(ks[1], (4 * H, H), jnp.float32) * 0.1  # LSTM.weight_ih_l0
    w_hh = jax.random.normal(ks[2], (4 * H, H), jnp.float32) * 0.1  # LSTM.weight_hh_l0
    b_ih = jax.random.normal(ks[3], (4 * H,), jnp.float32) * 0.1
    b_hh = jax.random.normal(ks[4], (4 * H,), jnp.float32) * 0.1
    w_fc = jax.random.normal(ks[5], (V, H), jnp.float32) * 0.1      # Linear.weight
    b_fc = jax.random.normal(ks[6], (V,), jnp.float32) * 0.1

    input_indexes = jax.random.randint(ks[7], (B,), 0, V, jnp.int32)
    hidden_state = jax.random.normal(ks[8], (1, B, H), jnp.float32)
    cell_state = jax.random.normal(ks[9], (1, B, H), jnp.float32)

    params = prepare_decoder_params(emb, w_ih, w_hh, b_ih, b_hh, w_fc, b_fc)
    # V=1000, H_pad=128 -> TILE_V=1024, V_pad=1024 -> grid=(1,)

    z, h, c = decoder_forward(input_indexes, hidden_state, cell_state, params)
    jax.block_until_ready((z, h, c))

    # pure-JAX reference (mirrors the kernel's bf16 weight rounding, f32 elsewhere)
    bf = lambda a: a.astype(jnp.bfloat16).astype(jnp.float32)
    x_r = bf(emb[input_indexes])
    h0_r = bf(hidden_state[0])
    gates = x_r @ bf(w_ih).T + h0_r @ bf(w_hh).T + b_ih + b_hh
    i_g = jax.nn.sigmoid(gates[:, 0:H])
    f_g = jax.nn.sigmoid(gates[:, H:2 * H])
    g_g = jnp.tanh(gates[:, 2 * H:3 * H])
    o_g = jax.nn.sigmoid(gates[:, 3 * H:4 * H])
    c_exp = f_g * cell_state[0] + i_g * g_g
    h_exp = o_g * jnp.tanh(c_exp)
    z_exp = bf(h_exp) @ bf(w_fc).T + b_fc

    assert z.shape == (B, V) and h.shape == (1, B, H) and c.shape == (1, B, H)
    assert jnp.allclose(h[0], h_exp, atol=2e-3), "hidden mismatch"
    assert jnp.allclose(c[0], c_exp, atol=2e-3), "cell mismatch"
    assert jnp.allclose(z, z_exp, atol=5e-3), "z mismatch"
    print("KERNEL_OK")
</pallas_src>

<mosaic_0001>
module attributes {stable_mosaic.version = 11 : i64} {
  func.func @decoder_kernel(%arg0: i32, %arg1: memref<8xi32, #tpu.memory_space<smem>>, %arg2: memref<1000x128xf32, #tpu.memory_space<any>>, %arg3: memref<8x128xf32, #tpu.memory_space<vmem>>, %arg4: memref<8x128xf32, #tpu.memory_space<vmem>>, %arg5: memref<256x512xbf16, #tpu.memory_space<vmem>>, %arg6: memref<1x512xf32, #tpu.memory_space<vmem>>, %arg7: memref<128x1024xbf16, #tpu.memory_space<vmem>>, %arg8: memref<1x1024xf32, #tpu.memory_space<vmem>>, %arg9: memref<8x1024xf32, #tpu.memory_space<vmem>>, %arg10: memref<8x128xf32, #tpu.memory_space<vmem>>, %arg11: memref<8x128xf32, #tpu.memory_space<vmem>>, %arg12: memref<8x128xf32, #tpu.memory_space<vmem>>, %arg13: memref<8x256xbf16, #tpu.memory_space<vmem>>, %arg14: memref<8x128xbf16, #tpu.memory_space<vmem>>, %arg15: memref<4x!tpu.dma_semaphore, #tpu.memory_space<semaphore_mem>>) attributes {dimension_semantics = [#tpu.dimension_semantics<arbitrary>], iteration_bounds = array<i64: 1>, scalar_prefetch = 1 : i64, scratch_operands = 4 : i64, tpu.core_type = #tpu.core_type<tc>, window_params = [{}, {pipeline_mode = #tpu.pipeline_mode<synchronous>, transform_indices = @transform_1, window_bounds = array<i64: 8, 128>}, {pipeline_mode = #tpu.pipeline_mode<synchronous>, transform_indices = @transform_2, window_bounds = array<i64: 8, 128>}, {pipeline_mode = #tpu.pipeline_mode<synchronous>, transform_indices = @transform_3, window_bounds = array<i64: 256, 512>}, {pipeline_mode = #tpu.pipeline_mode<synchronous>, transform_indices = @transform_4, window_bounds = array<i64: 1, 512>}, {transform_indices = @transform_5, window_bounds = array<i64: 128, 1024>}, {transform_indices = @transform_6, window_bounds = array<i64: 1, 1024>}, {transform_indices = @transform_7, window_bounds = array<i64: 8, 1024>}, {pipeline_mode = #tpu.pipeline_mode<synchronous>, transform_indices = @transform_8, window_bounds = array<i64: 8, 128>}, {pipeline_mode = #tpu.pipeline_mode<synchronous>, transform_indices = @transform_9, window_bounds = array<i64: 8, 128>}]} {
    %c0_i32 = arith.constant 0 : i32
    %0 = arith.cmpi eq, %arg0, %c0_i32 : i32
    %1 = arith.extui %0 : i1 to i32
    %c0_i32_0 = arith.constant 0 : i32
    %2 = arith.cmpi ne, %1, %c0_i32_0 : i32
    scf.if %2 {
      %c0_8 = arith.constant 0 : index
      %10 = memref.load %arg1[%c0_8] : memref<8xi32, #tpu.memory_space<smem>>
      %c0_i32_9 = arith.constant 0 : i32
      %c0_i32_10 = arith.constant 0 : i32
      %11 = tpu.memref_slice %arg2[%10, %c0_i32_10] : memref<1000x128xf32, #tpu.memory_space<any>> -> memref<1x128xf32, #tpu.memory_space<any>>
      %c0_i32_11 = arith.constant 0 : i32
      %c0_i32_12 = arith.constant 0 : i32
      %12 = tpu.memref_slice %arg12[%c0_i32_11, %c0_i32_12] : memref<8x128xf32, #tpu.memory_space<vmem>> -> memref<1x128xf32, #tpu.memory_space<vmem>>
      %13 = tpu.memref_slice %arg15[%c0_i32_9] : memref<4x!tpu.dma_semaphore, #tpu.memory_space<semaphore_mem>> -> memref<1x!tpu.dma_semaphore, #tpu.memory_space<semaphore_mem>>
      %14 = tpu.memref_squeeze %13 : memref<1x!tpu.dma_semaphore, #tpu.memory_space<semaphore_mem>> -> memref<!tpu.dma_semaphore, #tpu.memory_space<semaphore_mem>>
      tpu.enqueue_dma source(%11 : memref<1x128xf32, #tpu.memory_space<any>>) target(%12 : memref<1x128xf32, #tpu.memory_space<vmem>>) target_semaphore(%14 : memref<!tpu.dma_semaphore, #tpu.memory_space<semaphore_mem>>)
      %c1 = arith.constant 1 : index
      %15 = memref.load %arg1[%c1] : memref<8xi32, #tpu.memory_space<smem>>
      %c1_i32 = arith.constant 1 : i32
      %c0_i32_13 = arith.constant 0 : i32
      %16 = tpu.memref_slice %arg2[%15, %c0_i32_13] : memref<1000x128xf32, #tpu.memory_space<any>> -> memref<1x128xf32, #tpu.memory_space<any>>
      %c1_i32_14 = arith.constant 1 : i32
      %c0_i32_15 = arith.constant 0 : i32
      %17 = tpu.memref_slice %arg12[%c1_i32_14, %c0_i32_15] : memref<8x128xf32, #tpu.memory_space<vmem>> -> memref<1x128xf32, #tpu.memory_space<vmem>>
      %18 = tpu.memref_slice %arg15[%c1_i32] : memref<4x!tpu.dma_semaphore, #tpu.memory_space<semaphore_mem>> -> memref<1x!tpu.dma_semaphore, #tpu.memory_space<semaphore_mem>>
      %19 = tpu.memref_squeeze %18 : memref<1x!tpu.dma_semaphore, #tpu.memory_space<semaphore_mem>> -> memref<!tpu.dma_semaphore, #tpu.memory_space<semaphore_mem>>
      tpu.enqueue_dma source(%16 : memref<1x128xf32, #tpu.memory_space<any>>) target(%17 : memref<1x128xf32, #tpu.memory_space<vmem>>) target_semaphore(%19 : memref<!tpu.dma_semaphore, #tpu.memory_space<semaphore_mem>>)
      %c2 = arith.constant 2 : index
      %20 = memref.load %arg1[%c2] : memref<8xi32, #tpu.memory_space<smem>>
      %c2_i32 = arith.constant 2 : i32
      %c0_i32_16 = arith.constant 0 : i32
      %21 = tpu.memref_slice %arg2[%20, %c0_i32_16] : memref<1000x128xf32, #tpu.memory_space<any>> -> memref<1x128xf32, #tpu.memory_space<any>>
      %c2_i32_17 = arith.constant 2 : i32
      %c0_i32_18 = arith.constant 0 : i32
      %22 = tpu.memref_slice %arg12[%c2_i32_17, %c0_i32_18] : memref<8x128xf32, #tpu.memory_space<vmem>> -> memref<1x128xf32, #tpu.memory_space<vmem>>
      %23 = tpu.memref_slice %arg15[%c2_i32] : memref<4x!tpu.dma_semaphore, #tpu.memory_space<semaphore_mem>> -> memref<1x!tpu.dma_semaphore, #tpu.memory_space<semaphore_mem>>
      %24 = tpu.memref_squeeze %23 : memref<1x!tpu.dma_semaphore, #tpu.memory_space<semaphore_mem>> -> memref<!tpu.dma_semaphore, #tpu.memory_space<semaphore_mem>>
      tpu.enqueue_dma source(%21 : memref<1x128xf32, #tpu.memory_space<any>>) target(%22 : memref<1x128xf32, #tpu.memory_space<vmem>>) target_semaphore(%24 : memref<!tpu.dma_semaphore, #tpu.memory_space<semaphore_mem>>)
      %c3 = arith.constant 3 : index
      %25 = memref.load %arg1[%c3] : memref<8xi32, #tpu.memory_space<smem>>
      %c3_i32 = arith.constant 3 : i32
      %c0_i32_19 = arith.constant 0 : i32
      %26 = tpu.memref_slice %arg2[%25, %c0_i32_19] : memref<1000x128xf32, #tpu.memory_space<any>> -> memref<1x128xf32, #tpu.memory_space<any>>
      %c3_i32_20 = arith.constant 3 : i32
      %c0_i32_21 = arith.constant 0 : i32
      %27 = tpu.memref_slice %arg12[%c3_i32_20, %c0_i32_21] : memref<8x128xf32, #tpu.memory_space<vmem>> -> memref<1x128xf32, #tpu.memory_space<vmem>>
      %28 = tpu.memref_slice %arg15[%c3_i32] : memref<4x!tpu.dma_semaphore, #tpu.memory_space<semaphore_mem>> -> memref<1x!tpu.dma_semaphore, #tpu.memory_space<semaphore_mem>>
      %29 = tpu.memref_squeeze %28 : memref<1x!tpu.dma_semaphore, #tpu.memory_space<semaphore_mem>> -> memref<!tpu.dma_semaphore, #tpu.memory_space<semaphore_mem>>
      tpu.enqueue_dma source(%26 : memref<1x128xf32, #tpu.memory_space<any>>) target(%27 : memref<1x128xf32, #tpu.memory_space<vmem>>) target_semaphore(%29 : memref<!tpu.dma_semaphore, #tpu.memory_space<semaphore_mem>>)
      %cst_22 = arith.constant 0.000000e+00 : f32
      %30 = vector.broadcast %cst_22 : f32 to vector<4x128xf32>
      %c4 = arith.constant 4 : index
      %c0_23 = arith.constant 0 : index
      %31 = vector.load %arg12[%c4, %c0_23] : memref<8x128xf32, #tpu.memory_space<vmem>>, vector<4x128xf32>
      tpu.vector_store %arg12[%c4, %c0_23], %30 {strides = array<i32>} : memref<8x128xf32, #tpu.memory_space<vmem>>, vector<4x128xf32>,
      %c0_i32_24 = arith.constant 0 : i32
      %c0_i32_25 = arith.constant 0 : i32
      %32 = tpu.memref_slice %arg2[%10, %c0_i32_25] : memref<1000x128xf32, #tpu.memory_space<any>> -> memref<1x128xf32, #tpu.memory_space<any>>
      %c0_i32_26 = arith.constant 0 : i32
      %c0_i32_27 = arith.constant 0 : i32
      %33 = tpu.memref_slice %arg12[%c0_i32_26, %c0_i32_27] : memref<8x128xf32, #tpu.memory_space<vmem>> -> memref<1x128xf32, #tpu.memory_space<vmem>>
      %34 = tpu.memref_slice %arg15[%c0_i32_24] : memref<4x!tpu.dma_semaphore, #tpu.memory_space<semaphore_mem>> -> memref<1x!tpu.dma_semaphore, #tpu.memory_space<semaphore_mem>>
      %35 = tpu.memref_squeeze %34 : memref<1x!tpu.dma_semaphore, #tpu.memory_space<semaphore_mem>> -> memref<!tpu.dma_semaphore, #tpu.memory_space<semaphore_mem>>
      tpu.wait_dma2 semaphore(%35 : memref<!tpu.dma_semaphore, #tpu.memory_space<semaphore_mem>>) src(%32 : memref<1x128xf32, #tpu.memory_space<any>>) dst(%33 : memref<1x128xf32, #tpu.memory_space<vmem>>)
      %c1_i32_28 = arith.constant 1 : i32
      %c0_i32_29 = arith.constant 0 : i32
      %36 = tpu.memref_slice %arg2[%15, %c0_i32_29] : memref<1000x128xf32, #tpu.memory_space<any>> -> memref<1x128xf32, #tpu.memory_space<any>>
      %c1_i32_30 = arith.constant 1 : i32
      %c0_i32_31 = arith.constant 0 : i32
      %37 = tpu.memref_slice %arg12[%c1_i32_30, %c0_i32_31] : memref<8x128xf32, #tpu.memory_space<vmem>> -> memref<1x128xf32, #tpu.memory_space<vmem>>
      %38 = tpu.memref_slice %arg15[%c1_i32_28] : memref<4x!tpu.dma_semaphore, #tpu.memory_space<semaphore_mem>> -> memref<1x!tpu.dma_semaphore, #tpu.memory_space<semaphore_mem>>
      %39 = tpu.memref_squeeze %38 : memref<1x!tpu.dma_semaphore, #tpu.memory_space<semaphore_mem>> -> memref<!tpu.dma_semaphore, #tpu.memory_space<semaphore_mem>>
      tpu.wait_dma2 semaphore(%39 : memref<!tpu.dma_semaphore, #tpu.memory_space<semaphore_mem>>) src(%36 : memref<1x128xf32, #tpu.memory_space<any>>) dst(%37 : memref<1x128xf32, #tpu.memory_space<vmem>>)
      %c2_i32_32 = arith.constant 2 : i32
      %c0_i32_33 = arith.constant 0 : i32
      %40 = tpu.memref_slice %arg2[%20, %c0_i32_33] : memref<1000x128xf32, #tpu.memory_space<any>> -> memref<1x128xf32, #tpu.memory_space<any>>
      %c2_i32_34 = arith.constant 2 : i32
      %c0_i32_35 = arith.constant 0 : i32
      %41 = tpu.memref_slice %arg12[%c2_i32_34, %c0_i32_35] : memref<8x128xf32, #tpu.memory_space<vmem>> -> memref<1x128xf32, #tpu.memory_space<vmem>>
      %42 = tpu.memref_slice %arg15[%c2_i32_32] : memref<4x!tpu.dma_semaphore, #tpu.memory_space<semaphore_mem>> -> memref<1x!tpu.dma_semaphore, #tpu.memory_space<semaphore_mem>>
      %43 = tpu.memref_squeeze %42 : memref<1x!tpu.dma_semaphore, #tpu.memory_space<semaphore_mem>> -> memref<!tpu.dma_semaphore, #tpu.memory_space<semaphore_mem>>
      tpu.wait_dma2 semaphore(%43 : memref<!tpu.dma_semaphore, #tpu.memory_space<semaphore_mem>>) src(%40 : memref<1x128xf32, #tpu.memory_space<any>>) dst(%41 : memref<1x128xf32, #tpu.memory_space<vmem>>)
      %c3_i32_36 = arith.constant 3 : i32
      %c0_i32_37 = arith.constant 0 : i32
      %44 = tpu.memref_slice %arg2[%25, %c0_i32_37] : memref<1000x128xf32, #tpu.memory_space<any>> -> memref<1x128xf32, #tpu.memory_space<any>>
      %c3_i32_38 = arith.constant 3 : i32
      %c0_i32_39 = arith.constant 0 : i32
      %45 = tpu.memref_slice %arg12[%c3_i32_38, %c0_i32_39] : memref<8x128xf32, #tpu.memory_space<vmem>> -> memref<1x128xf32, #tpu.memory_space<vmem>>
      %46 = tpu.memref_slice %arg15[%c3_i32_36] : memref<4x!tpu.dma_semaphore, #tpu.memory_space<semaphore_mem>> -> memref<1x!tpu.dma_semaphore, #tpu.memory_space<semaphore_mem>>
      %47 = tpu.memref_squeeze %46 : memref<1x!tpu.dma_semaphore, #tpu.memory_space<semaphore_mem>> -> memref<!tpu.dma_semaphore, #tpu.memory_space<semaphore_mem>>
      tpu.wait_dma2 semaphore(%47 : memref<!tpu.dma_semaphore, #tpu.memory_space<semaphore_mem>>) src(%44 : memref<1x128xf32, #tpu.memory_space<any>>) dst(%45 : memref<1x128xf32, #tpu.memory_space<vmem>>)
      %c0_40 = arith.constant 0 : index
      %c0_41 = arith.constant 0 : index
      %48 = vector.load %arg12[%c0_40, %c0_41] : memref<8x128xf32, #tpu.memory_space<vmem>>, vector<8x128xf32>
      %49 = arith.truncf %48 : vector<8x128xf32> to vector<8x128xbf16>
      %c0_42 = arith.constant 0 : index
      %c0_43 = arith.constant 0 : index
      %50 = vector.load %arg13[%c0_42, %c0_43] : memref<8x256xbf16, #tpu.memory_space<vmem>>, vector<8x128xbf16>
      tpu.vector_store %arg13[%c0_42, %c0_43], %49 {strides = array<i32>} : memref<8x256xbf16, #tpu.memory_space<vmem>>, vector<8x128xbf16>,
      %c0_44 = arith.constant 0 : index
      %c0_45 = arith.constant 0 : index
      %51 = vector.load %arg3[%c0_44, %c0_45] : memref<8x128xf32, #tpu.memory_space<vmem>>, vector<8x128xf32>
      %52 = arith.truncf %51 : vector<8x128xf32> to vector<8x128xbf16>
      %c0_46 = arith.constant 0 : index
      %c128 = arith.constant 128 : index
      %53 = vector.load %arg13[%c0_46, %c128] : memref<8x256xbf16, #tpu.memory_space<vmem>>, vector<8x128xbf16>
      tpu.vector_store %arg13[%c0_46, %c128], %52 {strides = array<i32>} : memref<8x256xbf16, #tpu.memory_space<vmem>>, vector<8x128xbf16>,
      %c0_47 = arith.constant 0 : index
      %c0_48 = arith.constant 0 : index
      %54 = vector.load %arg13[%c0_47, %c0_48] : memref<8x256xbf16, #tpu.memory_space<vmem>>, vector<8x256xbf16>
      %c0_49 = arith.constant 0 : index
      %c0_50 = arith.constant 0 : index
      %55 = vector.load %arg5[%c0_49, %c0_50] : memref<256x512xbf16, #tpu.memory_space<vmem>>, vector<256x512xbf16>
      %cst_51 = arith.constant dense<0.000000e+00> : vector<8x512xf32>
      %56 = tpu.matmul %54, %55, %cst_51 {dimension_numbers = #tpu.dot_dimension_numbers<[1], [0], [0], [1], [0, 0, 1, 1], [], []>} : vector<8x256xbf16>, vector<256x512xbf16>, vector<8x512xf32> -> vector<8x512xf32>
      %c0_52 = arith.constant 0 : index
      %c0_53 = arith.constant 0 : index
      %57 = vector.load %arg6[%c0_52, %c0_53] : memref<1x512xf32, #tpu.memory_space<vmem>>, vector<1x512xf32>
      %58 = vector.broadcast %57 : vector<1x512xf32> to vector<8x512xf32>
      %59 = arith.addf %56, %58 : vector<8x512xf32>
      %60 = vector.extract_strided_slice %59 {offsets = [0, 0], sizes = [8, 128], strides = [1, 1]} : vector<8x512xf32> to vector<8x128xf32>
      %61 = arith.negf %60 : vector<8x128xf32>
      %62 = math.exp %61 : vector<8x128xf32>
      %cst_54 = arith.constant 1.000000e+00 : f32
      %63 = vector.broadcast %cst_54 : f32 to vector<8x128xf32>
      %64 = arith.addf %63, %62 : vector<8x128xf32>
      %65 = arith.divf %63, %64 : vector<8x128xf32>
      %66 = vector.extract_strided_slice %59 {offsets = [0, 128], sizes = [8, 128], strides = [1, 1]} : vector<8x512xf32> to vector<8x128xf32>
      %67 = arith.negf %66 : vector<8x128xf32>
      %68 = math.exp %67 : vector<8x128xf32>
      %cst_55 = arith.constant 1.000000e+00 : f32
      %69 = vector.broadcast %cst_55 : f32 to vector<8x128xf32>
      %70 = arith.addf %69, %68 : vector<8x128xf32>
      %71 = arith.divf %69, %70 : vector<8x128xf32>
      %72 = vector.extract_strided_slice %59 {offsets = [0, 256], sizes = [8, 128], strides = [1, 1]} : vector<8x512xf32> to vector<8x128xf32>
      %73 = math.tanh %72 : vector<8x128xf32>
      %74 = vector.extract_strided_slice %59 {offsets = [0, 384], sizes = [8, 128], strides = [1, 1]} : vector<8x512xf32> to vector<8x128xf32>
      %75 = arith.negf %74 : vector<8x128xf32>
      %76 = math.exp %75 : vector<8x128xf32>
      %cst_56 = arith.constant 1.000000e+00 : f32
      %77 = vector.broadcast %cst_56 : f32 to vector<8x128xf32>
      %78 = arith.addf %77, %76 : vector<8x128xf32>
      %79 = arith.divf %77, %78 : vector<8x128xf32>
      %c0_57 = arith.constant 0 : index
      %c0_58 = arith.constant 0 : index
      %80 = vector.load %arg4[%c0_57, %c0_58] : memref<8x128xf32, #tpu.memory_space<vmem>>, vector<8x128xf32>
      %81 = arith.mulf %71, %80 : vector<8x128xf32>
      %82 = arith.mulf %65, %73 : vector<8x128xf32>
      %83 = arith.addf %81, %82 : vector<8x128xf32>
      %84 = math.tanh %83 : vector<8x128xf32>
      %85 = arith.mulf %79, %84 : vector<8x128xf32>
      %c0_59 = arith.constant 0 : index
      %c0_60 = arith.constant 0 : index
      %86 = vector.load %arg11[%c0_59, %c0_60] : memref<8x128xf32, #tpu.memory_space<vmem>>, vector<8x128xf32>
      tpu.vector_store %arg11[%c0_59, %c0_60], %83 {strides = array<i32>} : memref<8x128xf32, #tpu.memory_space<vmem>>, vector<8x128xf32>,
      %c0_61 = arith.constant 0 : index
      %c0_62 = arith.constant 0 : index
      %87 = vector.load %arg10[%c0_61, %c0_62] : memref<8x128xf32, #tpu.memory_space<vmem>>, vector<8x128xf32>
      tpu.vector_store %arg10[%c0_61, %c0_62], %85 {strides = array<i32>} : memref<8x128xf32, #tpu.memory_space<vmem>>, vector<8x128xf32>,
      %88 = arith.truncf %85 : vector<8x128xf32> to vector<8x128xbf16>
      %c0_63 = arith.constant 0 : index
      %c0_64 = arith.constant 0 : index
      %89 = vector.load %arg14[%c0_63, %c0_64] : memref<8x128xbf16, #tpu.memory_space<vmem>>, vector<8x128xbf16>
      tpu.vector_store %arg14[%c0_63, %c0_64], %88 {strides = array<i32>} : memref<8x128xbf16, #tpu.memory_space<vmem>>, vector<8x128xbf16>,
    } else {
    }
    %c0 = arith.constant 0 : index
    %c0_1 = arith.constant 0 : index
    %3 = vector.load %arg14[%c0, %c0_1] : memref<8x128xbf16, #tpu.memory_space<vmem>>, vector<8x128xbf16>
    %c0_2 = arith.constant 0 : index
    %c0_3 = arith.constant 0 : index
    %4 = vector.load %arg7[%c0_2, %c0_3] : memref<128x1024xbf16, #tpu.memory_space<vmem>>, vector<128x1024xbf16>
    %cst = arith.constant dense<0.000000e+00> : vector<8x1024xf32>
    %5 = tpu.matmul %3, %4, %cst {dimension_numbers = #tpu.dot_dimension_numbers<[1], [0], [0], [1], [0, 0, 1, 1], [], []>} : vector<8x128xbf16>, vector<128x1024xbf16>, vector<8x1024xf32> -> vector<8x1024xf32>
    %c0_4 = arith.constant 0 : index
    %c0_5 = arith.constant 0 : index
    %6 = vector.load %arg8[%c0_4, %c0_5] : memref<1x1024xf32, #tpu.memory_space<vmem>>, vector<1x1024xf32>
    %7 = vector.broadcast %6 : vector<1x1024xf32> to vector<8x1024xf32>
    %8 = arith.addf %5, %7 : vector<8x1024xf32>
    %c0_6 = arith.constant 0 : index
    %c0_7 = arith.constant 0 : index
    %9 = vector.load %arg9[%c0_6, %c0_7] : memref<8x1024xf32, #tpu.memory_space<vmem>>, vector<8x1024xf32>
    tpu.vector_store %arg9[%c0_6, %c0_7], %8 {strides = array<i32>} : memref<8x1024xf32, #tpu.memory_space<vmem>>, vector<8x1024xf32>,
    return
  }
  func.func @transform_1(%arg0: i32, %arg1: memref<8xi32, #tpu.memory_space<smem>>) -> (i32, i32) {
    %c0_i32 = arith.constant 0 : i32
    %c0_i32_0 = arith.constant 0 : i32
    %c0_i32_1 = arith.constant 0 : i32
    return %c0_i32, %c0_i32_0 : i32, i32
  }
  func.func @transform_2(%arg0: i32, %arg1: memref<8xi32, #tpu.memory_space<smem>>) -> (i32, i32) {
    %c0_i32 = arith.constant 0 : i32
    %c0_i32_0 = arith.constant 0 : i32
    %c0_i32_1 = arith.constant 0 : i32
    return %c0_i32, %c0_i32_0 : i32, i32
  }
  func.func @transform_3(%arg0: i32, %arg1: memref<8xi32, #tpu.memory_space<smem>>) -> (i32, i32) {
    %c0_i32 = arith.constant 0 : i32
    %c0_i32_0 = arith.constant 0 : i32
    %c0_i32_1 = arith.constant 0 : i32
    return %c0_i32, %c0_i32_0 : i32, i32
  }
  func.func @transform_4(%arg0: i32, %arg1: memref<8xi32, #tpu.memory_space<smem>>) -> (i32, i32) {
    %c0_i32 = arith.constant 0 : i32
    %c0_i32_0 = arith.constant 0 : i32
    %c0_i32_1 = arith.constant 0 : i32
    return %c0_i32, %c0_i32_0 : i32, i32
  }
  func.func @transform_5(%arg0: i32, %arg1: memref<8xi32, #tpu.memory_space<smem>>) -> (i32, i32) {
    %c0_i32 = arith.constant 0 : i32
    %c0_i32_0 = arith.constant 0 : i32
    return %c0_i32, %arg0 : i32, i32
  }
  func.func @transform_6(%arg0: i32, %arg1: memref<8xi32, #tpu.memory_space<smem>>) -> (i32, i32) {
    %c0_i32 = arith.constant 0 : i32
    %c0_i32_0 = arith.constant 0 : i32
    return %c0_i32, %arg0 : i32, i32
  }
  func.func @transform_7(%arg0: i32, %arg1: memref<8xi32, #tpu.memory_space<smem>>) -> (i32, i32) {
    %c0_i32 = arith.constant 0 : i32
    %c0_i32_0 = arith.constant 0 : i32
    return %c0_i32, %arg0 : i32, i32
  }
  func.func @transform_8(%arg0: i32, %arg1: memref<8xi32, #tpu.memory_space<smem>>) -> (i32, i32) {
    %c0_i32 = arith.constant 0 : i32
    %c0_i32_0 = arith.constant 0 : i32
    %c0_i32_1 = arith.constant 0 : i32
    return %c0_i32, %c0_i32_0 : i32, i32
  }
  func.func @transform_9(%arg0: i32, %arg1: memref<8xi32, #tpu.memory_space<smem>>) -> (i32, i32) {
    %c0_i32 = arith.constant 0 : i32
    %c0_i32_0 = arith.constant 0 : i32
    %c0_i32_1 = arith.constant 0 : i32
    return %c0_i32, %c0_i32_0 : i32, i32
  }
}

</mosaic_0001>

<llo_original>
// kernel: tpu_custom_call.1
$region0: #{tpu_custom_call.1}
  #allocation0 [shape = 'u32[]', space=smem, size = 0x4, offset = 0x4, fixed_abs, tag = 'smem constant byte address 0x4 - core index']
  #allocation1 [shape = 'u32[144,128]{1,0:T(1,128)}', space=vmem, size = 0x12000, scoped, tag = 'internal scratch']
  #allocation2 [shape = 'f32[8,128]{1,0:T(8,128)}', space=vmem, size = 0x1000, scoped, tag = 'scratch operand']
  #allocation3 [shape = 'bf16[8,256]{1,0:T(8,128)(2,1)}', space=vmem, size = 0x1000, scoped, tag = 'scratch operand']
  #allocation4 [shape = 'bf16[8,128]{1,0:T(8,128)(2,1)}', space=vmem, size = 0x800, scoped, tag = 'scratch operand']
  #allocation5 [shape = 's32[4]{0}', space=sflag, size = 0x10, scoped, tag = 'scratch operand']
  #allocation6 [shape = 's32[1]{0}', space=sflag, size = 0x4, scoped, tag = 'scoped memory for tpu_custom_call.1']
  #allocation7 [shape = 'u8[512]{0}', space=smem, size = 0x200, scoped, tag = 'prefetched SMEM operand 0']
  #allocation20 [shape = 's32[]', space=sflag, size = 0x4, offset = 0, fixed_abs, tag = 'sflag constant byte address 0x0 - dummy sync flag']
  #allocation21 [shape = 's32[]', space=sflag, size = 0x4, offset = 0, fixed_abs, tag = 'sflag constant byte address 0x0 - dummy sync flag']
  #allocation22 [shape = 'u32[]', space=smem, size = 0x4, offset = 0x44, fixed_abs, tag = 'smem constant byte address 0x44 - assertion arg 0']
  #allocation23 [shape = 'u32[]', space=smem, size = 0x4, offset = 0x48, fixed_abs, tag = 'smem constant byte address 0x48 - assertion arg 1']
  #allocation24 [shape = 's32[]', space=sflag, size = 0x4, offset = 0, fixed_abs, tag = 'sflag constant byte address 0x0 - dummy sync flag']
  #allocation25 [shape = 's32[]', space=sflag, size = 0x4, offset = 0, fixed_abs, tag = 'sflag constant byte address 0x0 - dummy sync flag']
  #allocation26 [shape = 's32[]', space=sflag, size = 0x4, offset = 0, fixed_abs, tag = 'sflag constant byte address 0x0 - dummy sync flag']
  #allocation27 [shape = 's32[]', space=sflag, size = 0x4, offset = 0, fixed_abs, tag = 'sflag constant byte address 0x0 - dummy sync flag']
  #allocation28 [shape = 's32[]', space=sflag, size = 0x4, offset = 0, fixed_abs, tag = 'sflag constant byte address 0x0 - dummy sync flag']
  #allocation29 [shape = 's32[]', space=sflag, size = 0x4, offset = 0, fixed_abs, tag = 'sflag constant byte address 0x0 - dummy sync flag']
  %s0 = inlined_call_operand.hbm [shape: s32[8], index: 0, kind: input, shape index: {}]
  %s1 = inlined_call_operand.hbm [shape: f32[1000,128], index: 1, kind: input, shape index: {}]
  %s2 = inlined_call_operand.hbm [shape: f32[8,128], index: 2, kind: input, shape index: {}]
  %s3 = inlined_call_operand.vmem [shape: f32[8,128], index: 3, kind: input, shape index: {}]
  %s4 = inlined_call_operand.hbm [shape: bf16[256,512], index: 4, kind: input, shape index: {}]
  %s5 = inlined_call_operand.hbm [shape: f32[1,512], index: 5, kind: input, shape index: {}]
  %s6 = inlined_call_operand.hbm [shape: bf16[128,1024], index: 6, kind: input, shape index: {}]
  %s7 = inlined_call_operand.vmem [shape: f32[1,1024], index: 7, kind: input, shape index: {}]
  %s8 = inlined_call_operand.hbm [shape: f32[8,1024], index: 8, kind: output, shape index: {0}]
  %s9 = inlined_call_operand.hbm [shape: f32[8,128], index: 9, kind: output, shape index: {1}]
  %s10 = inlined_call_operand.hbm [shape: f32[8,128], index: 10, kind: output, shape index: {2}]
  %11 = xla_tuple %s8, %s9, %s10
  %s12 = sld [smem:[#allocation0]]
  $region86: #{tpu_custom_call.1} parent=0
    _
  %s14 = ssub.s32 1, %s12
  %s15 = scalar_select 0, %s14, %s12
  %17 = dma.hbm_to_smem %s0, 16, [#allocation7], [#allocation6]
  %18 = dma.done [#allocation6], 16
  %19 = sfence
  $region1: #{tpu_custom_call.1} parent=0
    #allocation8 [shape = 'u8[4096]{0}', space=vmem, size = 0x1000, scoped, tag = 'input window, operand 2, single buffered']
    #allocation9 [shape = 's32[1]{0}', space=sflag, size = 0x4, scoped, tag = 'scoped memory for tpu_custom_call.1']
    #allocation10 [shape = 's32[1]{0}', space=sflag, size = 0x4, scoped, tag = 'scoped memory for tpu_custom_call.1']
    #allocation11 [shape = 'u8[262144]{0}', space=vmem, size = 0x40000, scoped, tag = 'input window, operand 4, single buffered']
    #allocation12 [shape = 's32[1]{0}', space=sflag, size = 0x4, scoped, tag = 'scoped memory for tpu_custom_call.1']
    #allocation13 [shape = 'u8[2048]{0}', space=vmem, size = 0x800, scoped, tag = 'input window, operand 5, single buffered']
    #allocation14 [shape = 'u8[262144]{0}', space=vmem, size = 0x40000, scoped, tag = 'input window, operand 6, single buffered']
    #allocation15 [shape = 's32[1]{0}', space=sflag, size = 0x4, scoped, tag = 'scoped memory for tpu_custom_call.1']
    #allocation16 [shape = 'u8[32768]{0}', space=vmem, size = 0x8000, scoped, tag = 'output window, operand 0, single buffered']
    #allocation17 [shape = 'u8[4096]{0}', space=vmem, size = 0x1000, scoped, tag = 'output window, operand 1, single buffered']
    #allocation18 [shape = 's32[1]{0}', space=sflag, size = 0x4, scoped, tag = 'scoped memory for tpu_custom_call.1']
    #allocation19 [shape = 'u8[4096]{0}', space=vmem, size = 0x1000, scoped, tag = 'output window, operand 2, single buffered']
    %20 = vsyncpa [#allocation9], 0
    %21 = vsyncpa [#allocation12], 0
    %22 = vsyncpa [#allocation15], 0
    %23 = vsyncpa [#allocation10], 0
    %24 = vsyncpa [#allocation18], 0
    // Predicated region
    $region2: #{tpu_custom_call.1} parent=1 // pred_check
      _
    $region3: #{tpu_custom_call.1} parent=1 // pred_check_branch
      %26 = sbr.rel (0) target = $region5
    $region4: #{tpu_custom_call.1} parent=1 // pred_region
      %s28 = ssub.s32 128, 128
      %29 = vsyncadd [#allocation9], %s28
      %s31 = sshll.u32 [#allocation8], 4
      %s32 = int_to_ptr.vmem [resolvable:$true] %s31
      %34 = dma.hbm_to_vmem [thread:$0]  %s2, 128, %s32, [#allocation9]
    $region5: #{tpu_custom_call.1} parent=1 // pred_fallthru
      _
    // Predicated region
    $region6: #{tpu_custom_call.1} parent=1 // pred_check
      _
    $region7: #{tpu_custom_call.1} parent=1 // pred_check_branch
      %36 = sbr.rel (0) target = $region9
    $region8: #{tpu_custom_call.1} parent=1 // pred_region
      _
    $region9: #{tpu_custom_call.1} parent=1 // pred_fallthru
      _
    // Predicated region
    $region10: #{tpu_custom_call.1} parent=1 // pred_check
      _
    $region11: #{tpu_custom_call.1} parent=1 // pred_check_branch
      %38 = sbr.rel (0) target = $region13
    $region12: #{tpu_custom_call.1} parent=1 // pred_region
      %s40 = ssub.s32 8192, 8192
      %41 = vsyncadd [#allocation12], %s40
      %s42 = sshll.u32 [#allocation11], 4
      %s43 = int_to_ptr.vmem [resolvable:$true] %s42
      %48 = dma.hbm_to_vmem [thread:$0]  %s4, 8192, %s43, [#allocation12], 256, 256, 16
    $region13: #{tpu_custom_call.1} parent=1 // pred_fallthru
      _
    // Predicated region
    $region14: #{tpu_custom_call.1} parent=1 // pred_check
      _
    $region15: #{tpu_custom_call.1} parent=1 // pred_check_branch
      %50 = sbr.rel (0) target = $region17
    $region16: #{tpu_custom_call.1} parent=1 // pred_region
      %s52 = ssub.s32 64, 64
      %53 = vsyncadd [#allocation12], %s52
      %s55 = sshll.u32 [#allocation13], 4
      %s56 = int_to_ptr.vmem [resolvable:$true] %s55
      %58 = dma.hbm_to_vmem [thread:$0]  %s5, 64, %s56, [#allocation12]
    $region17: #{tpu_custom_call.1} parent=1 // pred_fallthru
      _
    // Predicated region
    $region18: #{tpu_custom_call.1} parent=1 // pred_check
      _
    $region19: #{tpu_custom_call.1} parent=1 // pred_check_branch
      %60 = sbr.rel (0) target = $region21
    $region20: #{tpu_custom_call.1} parent=1 // pred_region
      %s62 = ssub.s32 8192, 8192
      %63 = vsyncadd [#allocation15], %s62
      %s64 = sshll.u32 [#allocation14], 4
      %s65 = int_to_ptr.vmem [resolvable:$true] %s64
      %70 = dma.hbm_to_vmem [thread:$0]  %s6, 8192, %s65, [#allocation15], 512, 512, 32
    $region21: #{tpu_custom_call.1} parent=1 // pred_fallthru
      _
    // Predicated region
    $region22: #{tpu_custom_call.1} parent=1 // pred_check
      _
    $region23: #{tpu_custom_call.1} parent=1 // pred_check_branch
      %72 = sbr.rel (0) target = $region25
    $region24: #{tpu_custom_call.1} parent=1 // pred_region
      _
    $region25: #{tpu_custom_call.1} parent=1 // pred_fallthru
      _
    // Predicated region
    $region26: #{tpu_custom_call.1} parent=1 // pred_check
      _
    $region27: #{tpu_custom_call.1} parent=1 // pred_check_branch
      %74 = sbr.rel (0) target = $region29
    $region28: #{tpu_custom_call.1} parent=1 // pred_region
      %75 = dma.done [#allocation9], 128
    $region29: #{tpu_custom_call.1} parent=1 // pred_fallthru
      _
    // Predicated region
    $region30: #{tpu_custom_call.1} parent=1 // pred_check
      _
    $region31: #{tpu_custom_call.1} parent=1 // pred_check_branch
      %77 = sbr.rel (0) target = $region33
    $region32: #{tpu_custom_call.1} parent=1 // pred_region
      %78 = dma.done [#allocation12], 8192
    $region33: #{tpu_custom_call.1} parent=1 // pred_fallthru
      _
    // Predicated region
    $region34: #{tpu_custom_call.1} parent=1 // pred_check
      _
    $region35: #{tpu_custom_call.1} parent=1 // pred_check_branch
      %80 = sbr.rel (0) target = $region37
    $region36: #{tpu_custom_call.1} parent=1 // pred_region
      %81 = dma.done [#allocation12], 64
    $region37: #{tpu_custom_call.1} parent=1 // pred_fallthru
      _
    // Predicated region
    $region38: #{tpu_custom_call.1} parent=1 // pred_check
      _
    $region39: #{tpu_custom_call.1} parent=1 // pred_check_branch
      %83 = sbr.rel (0) target = $region41
    $region40: #{tpu_custom_call.1} parent=1 // pred_region
      %84 = dma.done [#allocation15], 8192
    $region41: #{tpu_custom_call.1} parent=1 // pred_fallthru
      _
    %p86 = scmp.eq.s32.totalorder 0, 0
    // Predicated region
    $region42: #{tpu_custom_call.1} parent=1 // pred_check
      %p87 = pneg %p86
    $region43: #{tpu_custom_call.1} parent=1 // pred_check_branch
      %89 = sbr.rel (%p87) target = $region45
    $region44: #{tpu_custom_call.1} parent=1 // pred_region
      %s90 = sld [smem:[#allocation7]]
      %s91 = smul.addr %s90, 16
      %s92 = scalar_lea.hbm %s1, %s91
      // Predicated region
      $region46: #{tpu_custom_call.1} parent=44 // pred_check
        _
      $region47: #{tpu_custom_call.1} parent=44 // pred_check_branch
        %94 = sbr.rel target = $region49
      $region48: #{tpu_custom_call.1} parent=44 // pred_region
        %95 = sst [smem:[#allocation22]] [#allocation21]
        %96 = sst [smem:[#allocation23]] [#allocation20]
      $region49: #{tpu_custom_call.1} parent=44 // pred_fallthru
        _
      %98 = shalt.err (0)
      %s100 = sshll.u32 [#allocation2], 4
      %s101 = int_to_ptr.vmem [resolvable:$true] %s100
      %103 = dma.hbm_to_vmem [thread:$0]  %s92, 16, %s101, [#allocation5]
      %s104 = sld [smem:[#allocation7 + $0x1]]
      %s105 = smul.addr %s104, 16
      %s106 = scalar_lea.hbm %s1, %s105
      %s107 = scalar_lea.vmem [#allocation2], 1
      %s108 = scalar_lea.sflag [#allocation5], 1
      // Predicated region
      $region50: #{tpu_custom_call.1} parent=44 // pred_check
        _
      $region51: #{tpu_custom_call.1} parent=44 // pred_check_branch
        %110 = sbr.rel target = $region53
      $region52: #{tpu_custom_call.1} parent=44 // pred_region
        %111 = sst [smem:[#allocation22]] [#allocation25]
        %112 = sst [smem:[#allocation23]] [#allocation24]
      $region53: #{tpu_custom_call.1} parent=44 // pred_fallthru
        _
      %114 = shalt.err (0)
      %s116 = sshll.u32 %s107, 4
      %s117 = int_to_ptr.vmem [resolvable:$true] %s116
      %119 = dma.hbm_to_vmem [thread:$0]  %s106, 16, %s117, %s108
      %s120 = sld [smem:[#allocation7 + $0x2]]
      %s121 = smul.addr %s120, 16
      %s122 = scalar_lea.hbm %s1, %s121
      %s123 = scalar_lea.vmem [#allocation2], 2
      %s124 = scalar_lea.sflag [#allocation5], 2
      // Predicated region
      $region54: #{tpu_custom_call.1} parent=44 // pred_check
        _
      $region55: #{tpu_custom_call.1} parent=44 // pred_check_branch
        %126 = sbr.rel target = $region57
      $region56: #{tpu_custom_call.1} parent=44 // pred_region
        %127 = sst [smem:[#allocation22]] [#allocation27]
        %128 = sst [smem:[#allocation23]] [#allocation26]
      $region57: #{tpu_custom_call.1} parent=44 // pred_fallthru
        _
      %130 = shalt.err (0)
      %s132 = sshll.u32 %s123, 4
      %s133 = int_to_ptr.vmem [resolvable:$true] %s132
      %135 = dma.hbm_to_vmem [thread:$0]  %s122, 16, %s133, %s124
      %s136 = sld [smem:[#allocation7 + $0x3]]
      %s137 = smul.addr %s136, 16
      %s138 = scalar_lea.hbm %s1, %s137
      %s139 = scalar_lea.vmem [#allocation2], 3
      %s140 = scalar_lea.sflag [#allocation5], 3
      // Predicated region
      $region58: #{tpu_custom_call.1} parent=44 // pred_check
        _
      $region59: #{tpu_custom_call.1} parent=44 // pred_check_branch
        %142 = sbr.rel target = $region61
      $region60: #{tpu_custom_call.1} parent=44 // pred_region
        %143 = sst [smem:[#allocation22]] [#allocation29]
        %144 = sst [smem:[#allocation23]] [#allocation28]
      $region61: #{tpu_custom_call.1} parent=44 // pred_fallthru
        _
      %146 = shalt.err (0)
      %s148 = sshll.u32 %s139, 4
      %s149 = int_to_ptr.vmem [resolvable:$true] %s148
      %151 = dma.hbm_to_vmem [thread:$0]  %s138, 16, %s149, %s140
      %152 = vst [vmem:[#allocation2 + $0x4] sm:$0xf] 0.0
      %s153 = smul.u32 1, 1
      %s154 = sshll.u32 %s153, 4
      %155 = dma.done [#allocation5], %s154
      %s156 = sshll.u32 %s153, 4
      %157 = dma.done %s108, %s156
      %s158 = sshll.u32 %s153, 4
      %159 = dma.done %s124, %s158
      %s160 = sshll.u32 %s153, 4
      %161 = dma.done %s140, %s160
      %v162 = vld [vmem:[#allocation2] sm:$0xff]
      %v163 = vpack.c.bf16 %v162, %v162
      %164 = vst [vmem:[#allocation3] sm:$0xf] %v163
      %v165 = vld [vmem:[#allocation8] sm:$0xff]
      %v166 = vpack.c.bf16 %v165, %v165
      %167 = vst [vmem:[#allocation3 + $0x4] sm:$0xf] %v166
      %v168 = vld [vmem:[#allocation3] sm:$0xff]
      %v169 = vld [vmem:[#allocation11] sm:$0xff]
      %v170 = vld [vmem:[#allocation11 + $0x8] sm:$0xff]
      %v171 = vld [vmem:[#allocation11 + $0x10] sm:$0xff]
      %v172 = vld [vmem:[#allocation11 + $0x18] sm:$0xff]
      %v173 = vld [vmem:[#allocation11 + $0x20] sm:$0xff]
      %v174 = vld [vmem:[#allocation11 + $0x28] sm:$0xff]
      %v175 = vld [vmem:[#allocation11 + $0x30] sm:$0xff]
      %v176 = vld [vmem:[#allocation11 + $0x38] sm:$0xff]
      %v177 = vld [vmem:[#allocation11 + $0x40] sm:$0xff]
      %v178 = vld [vmem:[#allocation11 + $0x48] sm:$0xff]
      %v179 = vld [vmem:[#allocation11 + $0x50] sm:$0xff]
      %v180 = vld [vmem:[#allocation11 + $0x58] sm:$0xff]
      %v181 = vld [vmem:[#allocation11 + $0x60] sm:$0xff]
      %v182 = vld [vmem:[#allocation11 + $0x68] sm:$0xff]
      %v183 = vld [vmem:[#allocation11 + $0x70] sm:$0xff]
      %v184 = vld [vmem:[#allocation11 + $0x78] sm:$0xff]
      %v185 = vld [vmem:[#allocation11 + $0x80] sm:$0xff]
      %v186 = vld [vmem:[#allocation11 + $0x88] sm:$0xff]
      %v187 = vld [vmem:[#allocation11 + $0x90] sm:$0xff]
      %v188 = vld [vmem:[#allocation11 + $0x98] sm:$0xff]
      %v189 = vld [vmem:[#allocation11 + $0xa0] sm:$0xff]
      %v190 = vld [vmem:[#allocation11 + $0xa8] sm:$0xff]
      %v191 = vld [vmem:[#allocation11 + $0xb0] sm:$0xff]
      %v192 = vld [vmem:[#allocation11 + $0xb8] sm:$0xff]
      %v193 = vld [vmem:[#allocation11 + $0xc0] sm:$0xff]
      %v194 = vld [vmem:[#allocation11 + $0xc8] sm:$0xff]
      %v195 = vld [vmem:[#allocation11 + $0xd0] sm:$0xff]
      %v196 = vld [vmem:[#allocation11 + $0xd8] sm:$0xff]
      %v197 = vld [vmem:[#allocation11 + $0xe0] sm:$0xff]
      %v198 = vld [vmem:[#allocation11 + $0xe8] sm:$0xff]
      %v199 = vld [vmem:[#allocation11 + $0xf0] sm:$0xff]
      %v200 = vld [vmem:[#allocation11 + $0xf8] sm:$0xff]
      %v201 = vld [vmem:[#allocation11 + $0x100] sm:$0xff]
      %v202 = vld [vmem:[#allocation11 + $0x108] sm:$0xff]
      %v203 = vld [vmem:[#allocation11 + $0x110] sm:$0xff]
      %v204 = vld [vmem:[#allocation11 + $0x118] sm:$0xff]
      %v205 = vld [vmem:[#allocation11 + $0x120] sm:$0xff]
      %v206 = vld [vmem:[#allocation11 + $0x128] sm:$0xff]
      %v207 = vld [vmem:[#allocation11 + $0x130] sm:$0xff]
      %v208 = vld [vmem:[#allocation11 + $0x138] sm:$0xff]
      %v209 = vld [vmem:[#allocation11 + $0x140] sm:$0xff]
      %v210 = vld [vmem:[#allocation11 + $0x148] sm:$0xff]
      %v211 = vld [vmem:[#allocation11 + $0x150] sm:$0xff]
      %v212 = vld [vmem:[#allocation11 + $0x158] sm:$0xff]
      %v213 = vld [vmem:[#allocation11 + $0x160] sm:$0xff]
      %v214 = vld [vmem:[#allocation11 + $0x168] sm:$0xff]
      %v215 = vld [vmem:[#allocation11 + $0x170] sm:$0xff]
      %v216 = vld [vmem:[#allocation11 + $0x178] sm:$0xff]
      %v217 = vld [vmem:[#allocation11 + $0x180] sm:$0xff]
      %v218 = vld [vmem:[#allocation11 + $0x188] sm:$0xff]
      %v219 = vld [vmem:[#allocation11 + $0x190] sm:$0xff]
      %v220 = vld [vmem:[#allocation11 + $0x198] sm:$0xff]
      %v221 = vld [vmem:[#allocation11 + $0x1a0] sm:$0xff]
      %v222 = vld [vmem:[#allocation11 + $0x1a8] sm:$0xff]
      %v223 = vld [vmem:[#allocation11 + $0x1b0] sm:$0xff]
      %v224 = vld [vmem:[#allocation11 + $0x1b8] sm:$0xff]
      %v225 = vld [vmem:[#allocation11 + $0x1c0] sm:$0xff]
      %v226 = vld [vmem:[#allocation11 + $0x1c8] sm:$0xff]
      %v227 = vld [vmem:[#allocation11 + $0x1d0] sm:$0xff]
      %v228 = vld [vmem:[#allocation11 + $0x1d8] sm:$0xff]
      %v229 = vld [vmem:[#allocation11 + $0x1e0] sm:$0xff]
      %v230 = vld [vmem:[#allocation11 + $0x1e8] sm:$0xff]
      %v231 = vld [vmem:[#allocation11 + $0x1f0] sm:$0xff]
      %v232 = vld [vmem:[#allocation11 + $0x1f8] sm:$0xff]
      %v233 = vld [vmem:[#allocation13] sm:$0xf]
      %v235 = vlaneseq
      %v236 = vshrl.u32 %v235, 7
      %v237 = vsub.s32 0, %v236
      %v238 = vrot.slane %v233, %v237
      %v239 = vlaneseq
      %v240 = vshrl.u32 %v239, 7
      %v241 = vsub.s32 1, %v240
      %v242 = vrot.slane %v233, %v241
      %v243 = vlaneseq
      %v244 = vshrl.u32 %v243, 7
      %v245 = vsub.s32 2, %v244
      %v246 = vrot.slane %v233, %v245
      %v247 = vlaneseq
      %v248 = vshrl.u32 %v247, 7
      %v249 = vsub.s32 3, %v248
      %v250 = vrot.slane %v233, %v249
      %v256 = vunpack.c.l.b16 %v168
      %v257 = vunpack.c.h.b16 %v168
      %v258 = vpack.c.b16 %v256, %v256
      %v259 = vpack.c.b16 %v257, %v257
      %v326 = vunpack.c.l.b16 %v169
      %v327 = vunpack.c.h.b16 %v169
      %v328 = vunpack.c.l.b16 %v170
      %v329 = vunpack.c.h.b16 %v170
      %v330 = vunpack.c.l.b16 %v171
      %v331 = vunpack.c.h.b16 %v171
      %v332 = vunpack.c.l.b16 %v172
      %v333 = vunpack.c.h.b16 %v172
      %v334 = vunpack.c.l.b16 %v173
      %v335 = vunpack.c.h.b16 %v173
      %v336 = vunpack.c.l.b16 %v174
      %v337 = vunpack.c.h.b16 %v174
      %v338 = vunpack.c.l.b16 %v175
      %v339 = vunpack.c.h.b16 %v175
      %v340 = vunpack.c.l.b16 %v176
      %v341 = vunpack.c.h.b16 %v176
      %v342 = vunpack.c.l.b16 %v177
      %v343 = vunpack.c.h.b16 %v177
      %v344 = vunpack.c.l.b16 %v178
      %v345 = vunpack.c.h.b16 %v178
      %v346 = vunpack.c.l.b16 %v179
      %v347 = vunpack.c.h.b16 %v179
      %v348 = vunpack.c.l.b16 %v180
      %v349 = vunpack.c.h.b16 %v180
      %v350 = vunpack.c.l.b16 %v181
      %v351 = vunpack.c.h.b16 %v181
      %v352 = vunpack.c.l.b16 %v182
      %v353 = vunpack.c.h.b16 %v182
      %v354 = vunpack.c.l.b16 %v183
      %v355 = vunpack.c.h.b16 %v183
      %v356 = vunpack.c.l.b16 %v184
      %v357 = vunpack.c.h.b16 %v184
      %v358 = vunpack.c.l.b16 %v185
      %v359 = vunpack.c.h.b16 %v185
      %v360 = vunpack.c.l.b16 %v186
      %v361 = vunpack.c.h.b16 %v186
      %v362 = vunpack.c.l.b16 %v187
      %v363 = vunpack.c.h.b16 %v187
      %v364 = vunpack.c.l.b16 %v188
      %v365 = vunpack.c.h.b16 %v188
      %v366 = vunpack.c.l.b16 %v189
      %v367 = vunpack.c.h.b16 %v189
      %v368 = vunpack.c.l.b16 %v190
      %v369 = vunpack.c.h.b16 %v190
      %v370 = vunpack.c.l.b16 %v191
      %v371 = vunpack.c.h.b16 %v191
      %v372 = vunpack.c.l.b16 %v192
      %v373 = vunpack.c.h.b16 %v192
      %v374 = vunpack.c.l.b16 %v193
      %v375 = vunpack.c.h.b16 %v193
      %v376 = vunpack.c.l.b16 %v194
      %v377 = vunpack.c.h.b16 %v194
      %v378 = vunpack.c.l.b16 %v195
      %v379 = vunpack.c.h.b16 %v195
      %v380 = vunpack.c.l.b16 %v196
      %v381 = vunpack.c.h.b16 %v196
      %v382 = vunpack.c.l.b16 %v197
      %v383 = vunpack.c.h.b16 %v197
      %v384 = vunpack.c.l.b16 %v198
      %v385 = vunpack.c.h.b16 %v198
      %v386 = vunpack.c.l.b16 %v199
      %v387 = vunpack.c.h.b16 %v199
      %v388 = vunpack.c.l.b16 %v200
      %v389 = vunpack.c.h.b16 %v200
      %v390 = vunpack.c.l.b16 %v201
      %v391 = vunpack.c.h.b16 %v201
      %v392 = vunpack.c.l.b16 %v202
      %v393 = vunpack.c.h.b16 %v202
      %v394 = vunpack.c.l.b16 %v203
      %v395 = vunpack.c.h.b16 %v203
      %v396 = vunpack.c.l.b16 %v204
      %v397 = vunpack.c.h.b16 %v204
      %v398 = vunpack.c.l.b16 %v205
      %v399 = vunpack.c.h.b16 %v205
      %v400 = vunpack.c.l.b16 %v206
      %v401 = vunpack.c.h.b16 %v206
      %v402 = vunpack.c.l.b16 %v207
      %v403 = vunpack.c.h.b16 %v207
      %v404 = vunpack.c.l.b16 %v208
      %v405 = vunpack.c.h.b16 %v208
      %v406 = vunpack.c.l.b16 %v209
      %v407 = vunpack.c.h.b16 %v209
      %v408 = vunpack.c.l.b16 %v210
      %v409 = vunpack.c.h.b16 %v210
      %v410 = vunpack.c.l.b16 %v211
      %v411 = vunpack.c.h.b16 %v211
      %v412 = vunpack.c.l.b16 %v212
      %v413 = vunpack.c.h.b16 %v212
      %v414 = vunpack.c.l.b16 %v213
      %v415 = vunpack.c.h.b16 %v213
      %v416 = vunpack.c.l.b16 %v214
      %v417 = vunpack.c.h.b16 %v214
      %v418 = vunpack.c.l.b16 %v215
      %v419 = vunpack.c.h.b16 %v215
      %v420 = vunpack.c.l.b16 %v216
      %v421 = vunpack.c.h.b16 %v216
      %v422 = vunpack.c.l.b16 %v217
      %v423 = vunpack.c.h.b16 %v217
      %v424 = vunpack.c.l.b16 %v218
      %v425 = vunpack.c.h.b16 %v218
      %v426 = vunpack.c.l.b16 %v219
      %v427 = vunpack.c.h.b16 %v219
      %v428 = vunpack.c.l.b16 %v220
      %v429 = vunpack.c.h.b16 %v220
      %v430 = vunpack.c.l.b16 %v221
      %v431 = vunpack.c.h.b16 %v221
      %v432 = vunpack.c.l.b16 %v222
      %v433 = vunpack.c.h.b16 %v222
      %v434 = vunpack.c.l.b16 %v223
      %v435 = vunpack.c.h.b16 %v223
      %v436 = vunpack.c.l.b16 %v224
      %v437 = vunpack.c.h.b16 %v224
      %v438 = vunpack.c.l.b16 %v225
      %v439 = vunpack.c.h.b16 %v225
      %v440 = vunpack.c.l.b16 %v226
      %v441 = vunpack.c.h.b16 %v226
      %v442 = vunpack.c.l.b16 %v227
      %v443 = vunpack.c.h.b16 %v227
      %v444 = vunpack.c.l.b16 %v228
      %v445 = vunpack.c.h.b16 %v228
      %v446 = vunpack.c.l.b16 %v229
      %v447 = vunpack.c.h.b16 %v229
      %v448 = vunpack.c.l.b16 %v230
      %v449 = vunpack.c.h.b16 %v230
      %v450 = vunpack.c.l.b16 %v231
      %v451 = vunpack.c.h.b16 %v231
      %v452 = vunpack.c.l.b16 %v232
      %v453 = vunpack.c.h.b16 %v232
      %v454 = vpack.c.b16 %v330, %v326
      %v455 = vpack.c.b16 %v331, %v327
      %v456 = vpack.c.b16 %v332, %v328
      %v457 = vpack.c.b16 %v333, %v329
      %v458 = vpack.c.b16 %v338, %v334
      %v459 = vpack.c.b16 %v339, %v335
      %v460 = vpack.c.b16 %v340, %v336
      %v461 = vpack.c.b16 %v341, %v337
      %v462 = vpack.c.b16 %v346, %v342
      %v463 = vpack.c.b16 %v347, %v343
      %v464 = vpack.c.b16 %v348, %v344
      %v465 = vpack.c.b16 %v349, %v345
      %v466 = vpack.c.b16 %v354, %v350
      %v467 = vpack.c.b16 %v355, %v351
      %v468 = vpack.c.b16 %v356, %v352
      %v469 = vpack.c.b16 %v357, %v353
      %v470 = vpack.c.b16 %v362, %v358
      %v471 = vpack.c.b16 %v363, %v359
      %v472 = vpack.c.b16 %v364, %v360
      %v473 = vpack.c.b16 %v365, %v361
      %v474 = vpack.c.b16 %v370, %v366
      %v475 = vpack.c.b16 %v371, %v367
      %v476 = vpack.c.b16 %v372, %v368
      %v477 = vpack.c.b16 %v373, %v369
      %v478 = vpack.c.b16 %v378, %v374
      %v479 = vpack.c.b16 %v379, %v375
      %v480 = vpack.c.b16 %v380, %v376
      %v481 = vpack.c.b16 %v381, %v377
      %v482 = vpack.c.b16 %v386, %v382
      %v483 = vpack.c.b16 %v387, %v383
      %v484 = vpack.c.b16 %v388, %v384
      %v485 = vpack.c.b16 %v389, %v385
      %v486 = vpack.c.b16 %v394, %v390
      %v487 = vpack.c.b16 %v395, %v391
      %v488 = vpack.c.b16 %v396, %v392
      %v489 = vpack.c.b16 %v397, %v393
      %v490 = vpack.c.b16 %v402, %v398
      %v491 = vpack.c.b16 %v403, %v399
      %v492 = vpack.c.b16 %v404, %v400
      %v493 = vpack.c.b16 %v405, %v401
      %v494 = vpack.c.b16 %v410, %v406
      %v495 = vpack.c.b16 %v411, %v407
      %v496 = vpack.c.b16 %v412, %v408
      %v497 = vpack.c.b16 %v413, %v409
      %v498 = vpack.c.b16 %v418, %v414
      %v499 = vpack.c.b16 %v419, %v415
      %v500 = vpack.c.b16 %v420, %v416
      %v501 = vpack.c.b16 %v421, %v417
      %v502 = vpack.c.b16 %v426, %v422
      %v503 = vpack.c.b16 %v427, %v423
      %v504 = vpack.c.b16 %v428, %v424
      %v505 = vpack.c.b16 %v429, %v425
      %v506 = vpack.c.b16 %v434, %v430
      %v507 = vpack.c.b16 %v435, %v431
      %v508 = vpack.c.b16 %v436, %v432
      %v509 = vpack.c.b16 %v437, %v433
      %v510 = vpack.c.b16 %v442, %v438
      %v511 = vpack.c.b16 %v443, %v439
      %v512 = vpack.c.b16 %v444, %v440
      %v513 = vpack.c.b16 %v445, %v441
      %v514 = vpack.c.b16 %v450, %v446
      %v515 = vpack.c.b16 %v451, %v447
      %v516 = vpack.c.b16 %v452, %v448
      %v517 = vpack.c.b16 %v453, %v449
      %582 = vmatprep.subr.bf16.mxu0 %v455
      %583 = vmatpush1.bf16.msra.mxu0 %v454
      %584 = vmatprep.subr.bf16.mxu0 %v459
      %585 = vmatpush1.bf16.msra.mxu0 %v458
      %586 = vmatprep.subr.bf16.mxu0 %v463
      %587 = vmatpush1.bf16.msra.mxu0 %v462
      %588 = vmatprep.subr.bf16.mxu0 %v467
      %589 = vmatpush1.bf16.msra.mxu0 %v466
      %590 = vmatprep.subr.bf16.mxu0 %v471
      %591 = vmatpush1.bf16.msra.mxu0 %v470
      %592 = vmatprep.subr.bf16.mxu0 %v475
      %593 = vmatpush1.bf16.msra.mxu0 %v474
      %594 = vmatprep.subr.bf16.mxu0 %v479
      %595 = vmatpush1.bf16.msra.mxu0 %v478
      %596 = vmatprep.subr.bf16.mxu0 %v483
      %597 = vmatpush1.bf16.msra.mxu0 %v482
      %598 = vmatprep.subr.bf16.mxu0 %v487
      %599 = vmatpush1.bf16.msra.mxu0 %v486
      %600 = vmatprep.subr.bf16.mxu0 %v491
      %601 = vmatpush1.bf16.msra.mxu0 %v490
      %602 = vmatprep.subr.bf16.mxu0 %v495
      %603 = vmatpush1.bf16.msra.mxu0 %v494
      %604 = vmatprep.subr.bf16.mxu0 %v499
      %605 = vmatpush1.bf16.msra.mxu0 %v498
      %606 = vmatprep.subr.bf16.mxu0 %v503
      %607 = vmatpush1.bf16.msra.mxu0 %v502
      %608 = vmatprep.subr.bf16.mxu0 %v507
      %609 = vmatpush1.bf16.msra.mxu0 %v506
      %610 = vmatprep.subr.bf16.mxu0 %v511
      %611 = vmatpush1.bf16.msra.mxu0 %v510
      %612 = vmatprep.subr.bf16.mxu0 %v515
      %613 = vmatpush1.bf16.msra.mxu0 %v514
      %614 = vmatprep.mubr.bf16.mxu0 %v259
      %615 = vmatmul.mubr.bf16.gmra.mrb[0].mxu0 %v258
      %v616 = vpop.f32.mrb[0].mxu0
      %v617 = vadd.f32 %v238, %v616
      %v618 = vpop.f32.mrb[0].mxu0
      %v619 = vadd.f32 %v242, %v618
      %v620 = vpop.f32.mrb[0].mxu0
      %v621 = vpop.f32.mrb[0].mxu0
      %622 = vdwg.mxu0
      %623 = vmatprep.subr.bf16.mxu0 %v457
      %624 = vmatpush1.bf16.msra.mxu0 %v456
      %625 = vmatprep.subr.bf16.mxu0 %v461
      %626 = vmatpush1.bf16.msra.mxu0 %v460
      %627 = vmatprep.subr.bf16.mxu0 %v465
      %628 = vmatpush1.bf16.msra.mxu0 %v464
      %629 = vmatprep.subr.bf16.mxu0 %v469
      %630 = vmatpush1.bf16.msra.mxu0 %v468
      %631 = vmatprep.subr.bf16.mxu0 %v473
      %632 = vmatpush1.bf16.msra.mxu0 %v472
      %633 = vmatprep.subr.bf16.mxu0 %v477
      %634 = vmatpush1.bf16.msra.mxu0 %v476
      %635 = vmatprep.subr.bf16.mxu0 %v481
      %636 = vmatpush1.bf16.msra.mxu0 %v480
      %637 = vmatprep.subr.bf16.mxu0 %v485
      %638 = vmatpush1.bf16.msra.mxu0 %v484
      %639 = vmatprep.subr.bf16.mxu0 %v489
      %640 = vmatpush1.bf16.msra.mxu0 %v488
      %641 = vmatprep.subr.bf16.mxu0 %v493
      %642 = vmatpush1.bf16.msra.mxu0 %v492
      %643 = vmatprep.subr.bf16.mxu0 %v497
      %644 = vmatpush1.bf16.msra.mxu0 %v496
      %645 = vmatprep.subr.bf16.mxu0 %v501
      %646 = vmatpush1.bf16.msra.mxu0 %v500
      %647 = vmatprep.subr.bf16.mxu0 %v505
      %648 = vmatpush1.bf16.msra.mxu0 %v504
      %649 = vmatprep.subr.bf16.mxu0 %v509
      %650 = vmatpush1.bf16.msra.mxu0 %v508
      %651 = vmatprep.subr.bf16.mxu0 %v513
      %652 = vmatpush1.bf16.msra.mxu0 %v512
      %653 = vmatprep.subr.bf16.mxu0 %v517
      %654 = vmatpush1.bf16.msra.mxu0 %v516
      %655 = vmatprep.mubr.bf16.mxu0 %v259
      %656 = vmatmul.mubr.bf16.gmra.mrb[0].mxu0 %v258
      %v657 = vpop.f32.mrb[0].mxu0
      %v658 = vadd.f32 %v246, %v657
      %v659 = vpop.f32.mrb[0].mxu0
      %v660 = vadd.f32 %v250, %v659
      %v661 = vpop.f32.mrb[0].mxu0
      %v662 = vpop.f32.mrb[0].mxu0
      %663 = vdwg.mxu0
      %v664 = vxor.u32 %v617, 2147483648
      %v665 = vmul.f32 %v664, 1.442695
      %v666 = vpow.pop %v665
      %v667 = vadd.f32 %v666, 1.0
      %v668 = vrcp.pop %v667
      %v669 = vmul.f32 1.0, %v668
      %v670 = vxor.u32 %v619, 2147483648
      %v671 = vmul.f32 %v670, 1.442695
      %v672 = vpow.pop %v671
      %v673 = vadd.f32 %v672, 1.0
      %v674 = vrcp.pop %v673
      %v675 = vmul.f32 1.0, %v674
      %v676 = vtanh.pop %v658
      %v677 = vxor.u32 %v660, 2147483648
      %v678 = vmul.f32 %v677, 1.442695
      %v679 = vpow.pop %v678
      %v680 = vadd.f32 %v679, 1.0
      %v681 = vrcp.pop %v680
      %v682 = vmul.f32 1.0, %v681
      %v683 = vld [vmem:[%s3] sm:$0xff]
      %v684 = vmul.f32 %v675, %v683
      %v685 = vmul.f32 %v669, %v676
      %v686 = vadd.f32 %v684, %v685
      %v687 = vtanh.pop %v686
      %v688 = vmul.f32 %v682, %v687
      %689 = vst [vmem:[#allocation19] sm:$0xff] %v686
      %690 = vst [vmem:[#allocation17] sm:$0xff] %v688
      %v691 = vpack.c.bf16 %v688, %v688
      %692 = vst [vmem:[#allocation4] sm:$0xf] %v691
    $region45: #{tpu_custom_call.1} parent=1 // pred_fallthru
      _
    %v693 = vld [vmem:[#allocation4] sm:$0xf]
    %v694 = vld [vmem:[#allocation14] sm:$0xff]
    %v695 = vld [vmem:[#allocation14 + $0x8] sm:$0xff]
    %v696 = vld [vmem:[#allocation14 + $0x10] sm:$0xff]
    %v697 = vld [vmem:[#allocation14 + $0x18] sm:$0xff]
    %v698 = vld [vmem:[#allocation14 + $0x20] sm:$0xff]
    %v699 = vld [vmem:[#allocation14 + $0x28] sm:$0xff]
    %v700 = vld [vmem:[#allocation14 + $0x30] sm:$0xff]
    %v701 = vld [vmem:[#allocation14 + $0x38] sm:$0xff]
    %v702 = vld [vmem:[#allocation14 + $0x40] sm:$0xff]
    %v703 = vld [vmem:[#allocation14 + $0x48] sm:$0xff]
    %v704 = vld [vmem:[#allocation14 + $0x50] sm:$0xff]
    %v705 = vld [vmem:[#allocation14 + $0x58] sm:$0xff]
    %v706 = vld [vmem:[#allocation14 + $0x60] sm:$0xff]
    %v707 = vld [vmem:[#allocation14 + $0x68] sm:$0xff]
    %v708 = vld [vmem:[#allocation14 + $0x70] sm:$0xff]
    %v709 = vld [vmem:[#allocation14 + $0x78] sm:$0xff]
    %v710 = vld [vmem:[#allocation14 + $0x80] sm:$0xff]
    %v711 = vld [vmem:[#allocation14 + $0x88] sm:$0xff]
    %v712 = vld [vmem:[#allocation14 + $0x90] sm:$0xff]
    %v713 = vld [vmem:[#allocation14 + $0x98] sm:$0xff]
    %v714 = vld [vmem:[#allocation14 + $0xa0] sm:$0xff]
    %v715 = vld [vmem:[#allocation14 + $0xa8] sm:$0xff]
    %v716 = vld [vmem:[#allocation14 + $0xb0] sm:$0xff]
    %v717 = vld [vmem:[#allocation14 + $0xb8] sm:$0xff]
    %v718 = vld [vmem:[#allocation14 + $0xc0] sm:$0xff]
    %v719 = vld [vmem:[#allocation14 + $0xc8] sm:$0xff]
    %v720 = vld [vmem:[#allocation14 + $0xd0] sm:$0xff]
    %v721 = vld [vmem:[#allocation14 + $0xd8] sm:$0xff]
    %v722 = vld [vmem:[#allocation14 + $0xe0] sm:$0xff]
    %v723 = vld [vmem:[#allocation14 + $0xe8] sm:$0xff]
    %v724 = vld [vmem:[#allocation14 + $0xf0] sm:$0xff]
    %v725 = vld [vmem:[#allocation14 + $0xf8] sm:$0xff]
    %v726 = vld [vmem:[#allocation14 + $0x100] sm:$0xff]
    %v727 = vld [vmem:[#allocation14 + $0x108] sm:$0xff]
    %v728 = vld [vmem:[#allocation14 + $0x110] sm:$0xff]
    %v729 = vld [vmem:[#allocation14 + $0x118] sm:$0xff]
    %v730 = vld [vmem:[#allocation14 + $0x120] sm:$0xff]
    %v731 = vld [vmem:[#allocation14 + $0x128] sm:$0xff]
    %v732 = vld [vmem:[#allocation14 + $0x130] sm:$0xff]
    %v733 = vld [vmem:[#allocation14 + $0x138] sm:$0xff]
    %v734 = vld [vmem:[#allocation14 + $0x140] sm:$0xff]
    %v735 = vld [vmem:[#allocation14 + $0x148] sm:$0xff]
    %v736 = vld [vmem:[#allocation14 + $0x150] sm:$0xff]
    %v737 = vld [vmem:[#allocation14 + $0x158] sm:$0xff]
    %v738 = vld [vmem:[#allocation14 + $0x160] sm:$0xff]
    %v739 = vld [vmem:[#allocation14 + $0x168] sm:$0xff]
    %v740 = vld [vmem:[#allocation14 + $0x170] sm:$0xff]
    %v741 = vld [vmem:[#allocation14 + $0x178] sm:$0xff]
    %v742 = vld [vmem:[#allocation14 + $0x180] sm:$0xff]
    %v743 = vld [vmem:[#allocation14 + $0x188] sm:$0xff]
    %v744 = vld [vmem:[#allocation14 + $0x190] sm:$0xff]
    %v745 = vld [vmem:[#allocation14 + $0x198] sm:$0xff]
    %v746 = vld [vmem:[#allocation14 + $0x1a0] sm:$0xff]
    %v747 = vld [vmem:[#allocation14 + $0x1a8] sm:$0xff]
    %v748 = vld [vmem:[#allocation14 + $0x1b0] sm:$0xff]
    %v749 = vld [vmem:[#allocation14 + $0x1b8] sm:$0xff]
    %v750 = vld [vmem:[#allocation14 + $0x1c0] sm:$0xff]
    %v751 = vld [vmem:[#allocation14 + $0x1c8] sm:$0xff]
    %v752 = vld [vmem:[#allocation14 + $0x1d0] sm:$0xff]
    %v753 = vld [vmem:[#allocation14 + $0x1d8] sm:$0xff]
    %v754 = vld [vmem:[#allocation14 + $0x1e0] sm:$0xff]
    %v755 = vld [vmem:[#allocation14 + $0x1e8] sm:$0xff]
    %v756 = vld [vmem:[#allocation14 + $0x1f0] sm:$0xff]
    %v757 = vld [vmem:[#allocation14 + $0x1f8] sm:$0xff]
    %v758 = vld [vmem:[%s7] sm:$0xff]
    %v760 = vlaneseq
    %v761 = vshrl.u32 %v760, 7
    %v762 = vsub.s32 0, %v761
    %v763 = vrot.slane %v758, %v762
    %v764 = vlaneseq
    %v765 = vshrl.u32 %v764, 7
    %v766 = vsub.s32 1, %v765
    %v767 = vrot.slane %v758, %v766
    %v768 = vlaneseq
    %v769 = vshrl.u32 %v768, 7
    %v770 = vsub.s32 2, %v769
    %v771 = vrot.slane %v758, %v770
    %v772 = vlaneseq
    %v773 = vshrl.u32 %v772, 7
    %v774 = vsub.s32 3, %v773
    %v775 = vrot.slane %v758, %v774
    %v776 = vlaneseq
    %v777 = vshrl.u32 %v776, 7
    %v778 = vsub.s32 4, %v777
    %v779 = vrot.slane %v758, %v778
    %v780 = vlaneseq
    %v781 = vshrl.u32 %v780, 7
    %v782 = vsub.s32 5, %v781
    %v783 = vrot.slane %v758, %v782
    %v784 = vlaneseq
    %v785 = vshrl.u32 %v784, 7
    %v786 = vsub.s32 6, %v785
    %v787 = vrot.slane %v758, %v786
    %v788 = vlaneseq
    %v789 = vshrl.u32 %v788, 7
    %v790 = vsub.s32 7, %v789
    %v791 = vrot.slane %v758, %v790
    %v864 = vunpack.c.l.b16 %v694
    %v865 = vunpack.c.h.b16 %v694
    %v866 = vunpack.c.l.b16 %v695
    %v867 = vunpack.c.h.b16 %v695
    %v868 = vunpack.c.l.b16 %v696
    %v869 = vunpack.c.h.b16 %v696
    %v870 = vunpack.c.l.b16 %v697
    %v871 = vunpack.c.h.b16 %v697
    %v872 = vunpack.c.l.b16 %v698
    %v873 = vunpack.c.h.b16 %v698
    %v874 = vunpack.c.l.b16 %v699
    %v875 = vunpack.c.h.b16 %v699
    %v876 = vunpack.c.l.b16 %v700
    %v877 = vunpack.c.h.b16 %v700
    %v878 = vunpack.c.l.b16 %v701
    %v879 = vunpack.c.h.b16 %v701
    %v880 = vunpack.c.l.b16 %v702
    %v881 = vunpack.c.h.b16 %v702
    %v882 = vunpack.c.l.b16 %v703
    %v883 = vunpack.c.h.b16 %v703
    %v884 = vunpack.c.l.b16 %v704
    %v885 = vunpack.c.h.b16 %v704
    %v886 = vunpack.c.l.b16 %v705
    %v887 = vunpack.c.h.b16 %v705
    %v888 = vunpack.c.l.b16 %v706
    %v889 = vunpack.c.h.b16 %v706
    %v890 = vunpack.c.l.b16 %v707
    %v891 = vunpack.c.h.b16 %v707
    %v892 = vunpack.c.l.b16 %v708
    %v893 = vunpack.c.h.b16 %v708
    %v894 = vunpack.c.l.b16 %v709
    %v895 = vunpack.c.h.b16 %v709
    %v896 = vunpack.c.l.b16 %v710
    %v897 = vunpack.c.h.b16 %v710
    %v898 = vunpack.c.l.b16 %v711
    %v899 = vunpack.c.h.b16 %v711
    %v900 = vunpack.c.l.b16 %v712
    %v901 = vunpack.c.h.b16 %v712
    %v902 = vunpack.c.l.b16 %v713
    %v903 = vunpack.c.h.b16 %v713
    %v904 = vunpack.c.l.b16 %v714
    %v905 = vunpack.c.h.b16 %v714
    %v906 = vunpack.c.l.b16 %v715
    %v907 = vunpack.c.h.b16 %v715
    %v908 = vunpack.c.l.b16 %v716
    %v909 = vunpack.c.h.b16 %v716
    %v910 = vunpack.c.l.b16 %v717
    %v911 = vunpack.c.h.b16 %v717
    %v912 = vunpack.c.l.b16 %v718
    %v913 = vunpack.c.h.b16 %v718
    %v914 = vunpack.c.l.b16 %v719
    %v915 = vunpack.c.h.b16 %v719
    %v916 = vunpack.c.l.b16 %v720
    %v917 = vunpack.c.h.b16 %v720
    %v918 = vunpack.c.l.b16 %v721
    %v919 = vunpack.c.h.b16 %v721
    %v920 = vunpack.c.l.b16 %v722
    %v921 = vunpack.c.h.b16 %v722
    %v922 = vunpack.c.l.b16 %v723
    %v923 = vunpack.c.h.b16 %v723
    %v924 = vunpack.c.l.b16 %v724
    %v925 = vunpack.c.h.b16 %v724
    %v926 = vunpack.c.l.b16 %v725
    %v927 = vunpack.c.h.b16 %v725
    %v928 = vunpack.c.l.b16 %v726
    %v929 = vunpack.c.h.b16 %v726
    %v930 = vunpack.c.l.b16 %v727
    %v931 = vunpack.c.h.b16 %v727
    %v932 = vunpack.c.l.b16 %v728
    %v933 = vunpack.c.h.b16 %v728
    %v934 = vunpack.c.l.b16 %v729
    %v935 = vunpack.c.h.b16 %v729
    %v936 = vunpack.c.l.b16 %v730
    %v937 = vunpack.c.h.b16 %v730
    %v938 = vunpack.c.l.b16 %v731
    %v939 = vunpack.c.h.b16 %v731
    %v940 = vunpack.c.l.b16 %v732
    %v941 = vunpack.c.h.b16 %v732
    %v942 = vunpack.c.l.b16 %v733
    %v943 = vunpack.c.h.b16 %v733
    %v944 = vunpack.c.l.b16 %v734
    %v945 = vunpack.c.h.b16 %v734
    %v946 = vunpack.c.l.b16 %v735
    %v947 = vunpack.c.h.b16 %v735
    %v948 = vunpack.c.l.b16 %v736
    %v949 = vunpack.c.h.b16 %v736
    %v950 = vunpack.c.l.b16 %v737
    %v951 = vunpack.c.h.b16 %v737
    %v952 = vunpack.c.l.b16 %v738
    %v953 = vunpack.c.h.b16 %v738
    %v954 = vunpack.c.l.b16 %v739
    %v955 = vunpack.c.h.b16 %v739
    %v956 = vunpack.c.l.b16 %v740
    %v957 = vunpack.c.h.b16 %v740
    %v958 = vunpack.c.l.b16 %v741
    %v959 = vunpack.c.h.b16 %v741
    %v960 = vunpack.c.l.b16 %v742
    %v961 = vunpack.c.h.b16 %v742
    %v962 = vunpack.c.l.b16 %v743
    %v963 = vunpack.c.h.b16 %v743
    %v964 = vunpack.c.l.b16 %v744
    %v965 = vunpack.c.h.b16 %v744
    %v966 = vunpack.c.l.b16 %v745
    %v967 = vunpack.c.h.b16 %v745
    %v968 = vunpack.c.l.b16 %v746
    %v969 = vunpack.c.h.b16 %v746
    %v970 = vunpack.c.l.b16 %v747
    %v971 = vunpack.c.h.b16 %v747
    %v972 = vunpack.c.l.b16 %v748
    %v973 = vunpack.c.h.b16 %v748
    %v974 = vunpack.c.l.b16 %v749
    %v975 = vunpack.c.h.b16 %v749
    %v976 = vunpack.c.l.b16 %v750
    %v977 = vunpack.c.h.b16 %v750
    %v978 = vunpack.c.l.b16 %v751
    %v979 = vunpack.c.h.b16 %v751
    %v980 = vunpack.c.l.b16 %v752
    %v981 = vunpack.c.h.b16 %v752
    %v982 = vunpack.c.l.b16 %v753
    %v983 = vunpack.c.h.b16 %v753
    %v984 = vunpack.c.l.b16 %v754
    %v985 = vunpack.c.h.b16 %v754
    %v986 = vunpack.c.l.b16 %v755
    %v987 = vunpack.c.h.b16 %v755
    %v988 = vunpack.c.l.b16 %v756
    %v989 = vunpack.c.h.b16 %v756
    %v990 = vunpack.c.l.b16 %v757
    %v991 = vunpack.c.h.b16 %v757
    %v992 = vpack.c.b16 %v872, %v864
    %v993 = vpack.c.b16 %v873, %v865
    %v994 = vpack.c.b16 %v874, %v866
    %v995 = vpack.c.b16 %v875, %v867
    %v996 = vpack.c.b16 %v876, %v868
    %v997 = vpack.c.b16 %v877, %v869
    %v998 = vpack.c.b16 %v878, %v870
    %v999 = vpack.c.b16 %v879, %v871
    %v1000 = vpack.c.b16 %v888, %v880
    %v1001 = vpack.c.b16 %v889, %v881
    %v1002 = vpack.c.b16 %v890, %v882
    %v1003 = vpack.c.b16 %v891, %v883
    %v1004 = vpack.c.b16 %v892, %v884
    %v1005 = vpack.c.b16 %v893, %v885
    %v1006 = vpack.c.b16 %v894, %v886
    %v1007 = vpack.c.b16 %v895, %v887
    %v1008 = vpack.c.b16 %v904, %v896
    %v1009 = vpack.c.b16 %v905, %v897
    %v1010 = vpack.c.b16 %v906, %v898
    %v1011 = vpack.c.b16 %v907, %v899
    %v1012 = vpack.c.b16 %v908, %v900
    %v1013 = vpack.c.b16 %v909, %v901
    %v1014 = vpack.c.b16 %v910, %v902
    %v1015 = vpack.c.b16 %v911, %v903
    %v1016 = vpack.c.b16 %v920, %v912
    %v1017 = vpack.c.b16 %v921, %v913
    %v1018 = vpack.c.b16 %v922, %v914
    %v1019 = vpack.c.b16 %v923, %v915
    %v1020 = vpack.c.b16 %v924, %v916
    %v1021 = vpack.c.b16 %v925, %v917
    %v1022 = vpack.c.b16 %v926, %v918
    %v1023 = vpack.c.b16 %v927, %v919
    %v1024 = vpack.c.b16 %v936, %v928
    %v1025 = vpack.c.b16 %v937, %v929
    %v1026 = vpack.c.b16 %v938, %v930
    %v1027 = vpack.c.b16 %v939, %v931
    %v1028 = vpack.c.b16 %v940, %v932
    %v1029 = vpack.c.b16 %v941, %v933
    %v1030 = vpack.c.b16 %v942, %v934
    %v1031 = vpack.c.b16 %v943, %v935
    %v1032 = vpack.c.b16 %v952, %v944
    %v1033 = vpack.c.b16 %v953, %v945
    %v1034 = vpack.c.b16 %v954, %v946
    %v1035 = vpack.c.b16 %v955, %v947
    %v1036 = vpack.c.b16 %v956, %v948
    %v1037 = vpack.c.b16 %v957, %v949
    %v1038 = vpack.c.b16 %v958, %v950
    %v1039 = vpack.c.b16 %v959, %v951
    %v1040 = vpack.c.b16 %v968, %v960
    %v1041 = vpack.c.b16 %v969, %v961
    %v1042 = vpack.c.b16 %v970, %v962
    %v1043 = vpack.c.b16 %v971, %v963
    %v1044 = vpack.c.b16 %v972, %v964
    %v1045 = vpack.c.b16 %v973, %v965
    %v1046 = vpack.c.b16 %v974, %v966
    %v1047 = vpack.c.b16 %v975, %v967
    %v1048 = vpack.c.b16 %v984, %v976
    %v1049 = vpack.c.b16 %v985, %v977
    %v1050 = vpack.c.b16 %v986, %v978
    %v1051 = vpack.c.b16 %v987, %v979
    %v1052 = vpack.c.b16 %v988, %v980
    %v1053 = vpack.c.b16 %v989, %v981
    %v1054 = vpack.c.b16 %v990, %v982
    %v1055 = vpack.c.b16 %v991, %v983
    %1120 = vmatprep.subr.bf16.mxu0 %v993
    %1121 = vmatpush1.bf16.msra.mxu0 %v992
    %1122 = vmatprep.subr.bf16.mxu0 %v1001
    %1123 = vmatpush1.bf16.msra.mxu0 %v1000
    %1124 = vmatprep.subr.bf16.mxu0 %v1009
    %1125 = vmatpush1.bf16.msra.mxu0 %v1008
    %1126 = vmatprep.subr.bf16.mxu0 %v1017
    %1127 = vmatpush1.bf16.msra.mxu0 %v1016
    %1128 = vmatprep.subr.bf16.mxu0 %v1025
    %1129 = vmatpush1.bf16.msra.mxu0 %v1024
    %1130 = vmatprep.subr.bf16.mxu0 %v1033
    %1131 = vmatpush1.bf16.msra.mxu0 %v1032
    %1132 = vmatprep.subr.bf16.mxu0 %v1041
    %1133 = vmatpush1.bf16.msra.mxu0 %v1040
    %1134 = vmatprep.subr.bf16.mxu0 %v1049
    %1135 = vmatpush1.bf16.msra.mxu0 %v1048
    %1136 = vmatprep.subr.bf16.mxu0 0
    %1137 = vmatpush1.bf16.msra.mxu0 0
    %1138 = vmatprep.subr.bf16.mxu0 0
    %1139 = vmatpush1.bf16.msra.mxu0 0
    %1140 = vmatprep.subr.bf16.mxu0 0
    %1141 = vmatpush1.bf16.msra.mxu0 0
    %1142 = vmatprep.subr.bf16.mxu0 0
    %1143 = vmatpush1.bf16.msra.mxu0 0
    %1144 = vmatprep.subr.bf16.mxu0 0
    %1145 = vmatpush1.bf16.msra.mxu0 0
    %1146 = vmatprep.subr.bf16.mxu0 0
    %1147 = vmatpush1.bf16.msra.mxu0 0
    %1148 = vmatprep.subr.bf16.mxu0 0
    %1149 = vmatpush1.bf16.msra.mxu0 0
    %1150 = vmatprep.subr.bf16.mxu0 0
    %1151 = vmatpush1.bf16.msra.mxu0 0
    %1152 = vmatprep.mubr.bf16.mxu0 0
    %1153 = vmatmul.mubr.bf16.gmra.mrb[0].mxu0 %v693
    %v1154 = vpop.f32.mrb[0].mxu0
    %v1155 = vadd.f32 %v763, %v1154
    %v1156 = vpop.f32.mrb[0].mxu0
    %v1157 = vadd.f32 %v767, %v1156
    %v1158 = vpop.f32.mrb[0].mxu0
    %v1159 = vpop.f32.mrb[0].mxu0
    %1160 = vdwg.mxu0
    %1161 = vmatprep.subr.bf16.mxu0 %v995
    %1162 = vmatpush1.bf16.msra.mxu0 %v994
    %1163 = vmatprep.subr.bf16.mxu0 %v1003
    %1164 = vmatpush1.bf16.msra.mxu0 %v1002
    %1165 = vmatprep.subr.bf16.mxu0 %v1011
    %1166 = vmatpush1.bf16.msra.mxu0 %v1010
    %1167 = vmatprep.subr.bf16.mxu0 %v1019
    %1168 = vmatpush1.bf16.msra.mxu0 %v1018
    %1169 = vmatprep.subr.bf16.mxu0 %v1027
    %1170 = vmatpush1.bf16.msra.mxu0 %v1026
    %1171 = vmatprep.subr.bf16.mxu0 %v1035
    %1172 = vmatpush1.bf16.msra.mxu0 %v1034
    %1173 = vmatprep.subr.bf16.mxu0 %v1043
    %1174 = vmatpush1.bf16.msra.mxu0 %v1042
    %1175 = vmatprep.subr.bf16.mxu0 %v1051
    %1176 = vmatpush1.bf16.msra.mxu0 %v1050
    %1177 = vmatprep.subr.bf16.mxu0 0
    %1178 = vmatpush1.bf16.msra.mxu0 0
    %1179 = vmatprep.subr.bf16.mxu0 0
    %1180 = vmatpush1.bf16.msra.mxu0 0
    %1181 = vmatprep.subr.bf16.mxu0 0
    %1182 = vmatpush1.bf16.msra.mxu0 0
    %1183 = vmatprep.subr.bf16.mxu0 0
    %1184 = vmatpush1.bf16.msra.mxu0 0
    %1185 = vmatprep.subr.bf16.mxu0 0
    %1186 = vmatpush1.bf16.msra.mxu0 0
    %1187 = vmatprep.subr.bf16.mxu0 0
    %1188 = vmatpush1.bf16.msra.mxu0 0
    %1189 = vmatprep.subr.bf16.mxu0 0
    %1190 = vmatpush1.bf16.msra.mxu0 0
    %1191 = vmatprep.subr.bf16.mxu0 0
    %1192 = vmatpush1.bf16.msra.mxu0 0
    %1193 = vmatprep.mubr.bf16.mxu0 0
    %1194 = vmatmul.mubr.bf16.gmra.mrb[0].mxu0 %v693
    %v1195 = vpop.f32.mrb[0].mxu0
    %v1196 = vadd.f32 %v771, %v1195
    %v1197 = vpop.f32.mrb[0].mxu0
    %v1198 = vadd.f32 %v775, %v1197
    %v1199 = vpop.f32.mrb[0].mxu0
    %v1200 = vpop.f32.mrb[0].mxu0
    %1201 = vdwg.mxu0
    %1202 = vmatprep.subr.bf16.mxu0 %v997
    %1203 = vmatpush1.bf16.msra.mxu0 %v996
    %1204 = vmatprep.subr.bf16.mxu0 %v1005
    %1205 = vmatpush1.bf16.msra.mxu0 %v1004
    %1206 = vmatprep.subr.bf16.mxu0 %v1013
    %1207 = vmatpush1.bf16.msra.mxu0 %v1012
    %1208 = vmatprep.subr.bf16.mxu0 %v1021
    %1209 = vmatpush1.bf16.msra.mxu0 %v1020
    %1210 = vmatprep.subr.bf16.mxu0 %v1029
    %1211 = vmatpush1.bf16.msra.mxu0 %v1028
    %1212 = vmatprep.subr.bf16.mxu0 %v1037
    %1213 = vmatpush1.bf16.msra.mxu0 %v1036
    %1214 = vmatprep.subr.bf16.mxu0 %v1045
    %1215 = vmatpush1.bf16.msra.mxu0 %v1044
    %1216 = vmatprep.subr.bf16.mxu0 %v1053
    %1217 = vmatpush1.bf16.msra.mxu0 %v1052
    %1218 = vmatprep.subr.bf16.mxu0 0
    %1219 = vmatpush1.bf16.msra.mxu0 0
    %1220 = vmatprep.subr.bf16.mxu0 0
    %1221 = vmatpush1.bf16.msra.mxu0 0
    %1222 = vmatprep.subr.bf16.mxu0 0
    %1223 = vmatpush1.bf16.msra.mxu0 0
    %1224 = vmatprep.subr.bf16.mxu0 0
    %1225 = vmatpush1.bf16.msra.mxu0 0
    %1226 = vmatprep.subr.bf16.mxu0 0
    %1227 = vmatpush1.bf16.msra.mxu0 0
    %1228 = vmatprep.subr.bf16.mxu0 0
    %1229 = vmatpush1.bf16.msra.mxu0 0
    %1230 = vmatprep.subr.bf16.mxu0 0
    %1231 = vmatpush1.bf16.msra.mxu0 0
    %1232 = vmatprep.subr.bf16.mxu0 0
    %1233 = vmatpush1.bf16.msra.mxu0 0
    %1234 = vmatprep.mubr.bf16.mxu0 0
    %1235 = vmatmul.mubr.bf16.gmra.mrb[0].mxu0 %v693
    %v1236 = vpop.f32.mrb[0].mxu0
    %v1237 = vadd.f32 %v779, %v1236
    %v1238 = vpop.f32.mrb[0].mxu0
    %v1239 = vadd.f32 %v783, %v1238
    %v1240 = vpop.f32.mrb[0].mxu0
    %v1241 = vpop.f32.mrb[0].mxu0
    %1242 = vdwg.mxu0
    %1243 = vmatprep.subr.bf16.mxu0 %v999
    %1244 = vmatpush1.bf16.msra.mxu0 %v998
    %1245 = vmatprep.subr.bf16.mxu0 %v1007
    %1246 = vmatpush1.bf16.msra.mxu0 %v1006
    %1247 = vmatprep.subr.bf16.mxu0 %v1015
    %1248 = vmatpush1.bf16.msra.mxu0 %v1014
    %1249 = vmatprep.subr.bf16.mxu0 %v1023
    %1250 = vmatpush1.bf16.msra.mxu0 %v1022
    %1251 = vmatprep.subr.bf16.mxu0 %v1031
    %1252 = vmatpush1.bf16.msra.mxu0 %v1030
    %1253 = vmatprep.subr.bf16.mxu0 %v1039
    %1254 = vmatpush1.bf16.msra.mxu0 %v1038
    %1255 = vmatprep.subr.bf16.mxu0 %v1047
    %1256 = vmatpush1.bf16.msra.mxu0 %v1046
    %1257 = vmatprep.subr.bf16.mxu0 %v1055
    %1258 = vmatpush1.bf16.msra.mxu0 %v1054
    %1259 = vmatprep.subr.bf16.mxu0 0
    %1260 = vmatpush1.bf16.msra.mxu0 0
    %1261 = vmatprep.subr.bf16.mxu0 0
    %1262 = vmatpush1.bf16.msra.mxu0 0
    %1263 = vmatprep.subr.bf16.mxu0 0
    %1264 = vmatpush1.bf16.msra.mxu0 0
    %1265 = vmatprep.subr.bf16.mxu0 0
    %1266 = vmatpush1.bf16.msra.mxu0 0
    %1267 = vmatprep.subr.bf16.mxu0 0
    %1268 = vmatpush1.bf16.msra.mxu0 0
    %1269 = vmatprep.subr.bf16.mxu0 0
    %1270 = vmatpush1.bf16.msra.mxu0 0
    %1271 = vmatprep.subr.bf16.mxu0 0
    %1272 = vmatpush1.bf16.msra.mxu0 0
    %1273 = vmatprep.subr.bf16.mxu0 0
    %1274 = vmatpush1.bf16.msra.mxu0 0
    %1275 = vmatprep.mubr.bf16.mxu0 0
    %1276 = vmatmul.mubr.bf16.gmra.mrb[0].mxu0 %v693
    %v1277 = vpop.f32.mrb[0].mxu0
    %v1278 = vadd.f32 %v787, %v1277
    %v1279 = vpop.f32.mrb[0].mxu0
    %v1280 = vadd.f32 %v791, %v1279
    %v1281 = vpop.f32.mrb[0].mxu0
    %v1282 = vpop.f32.mrb[0].mxu0
    %1283 = vdwg.mxu0
    %1284 = vst [vmem:[#allocation16] sm:$0xff] %v1155
    %1285 = vst [vmem:[#allocation16 + $0x8] sm:$0xff] %v1157
    %1286 = vst [vmem:[#allocation16 + $0x10] sm:$0xff] %v1196
    %1287 = vst [vmem:[#allocation16 + $0x18] sm:$0xff] %v1198
    %1288 = vst [vmem:[#allocation16 + $0x20] sm:$0xff] %v1237
    %1289 = vst [vmem:[#allocation16 + $0x28] sm:$0xff] %v1239
    %1290 = vst [vmem:[#allocation16 + $0x30] sm:$0xff] %v1278
    %1291 = vst [vmem:[#allocation16 + $0x38] sm:$0xff] %v1280
    // Predicated region
    $region62: #{tpu_custom_call.1} parent=1 // pred_check
      _
    $region63: #{tpu_custom_call.1} parent=1 // pred_check_branch
      %1293 = sbr.rel (0) target = $region65
    $region64: #{tpu_custom_call.1} parent=1 // pred_region
      %s1295 = ssub.s32 1024, 1024
      %1296 = vsyncadd [#allocation10], %s1295
      %s1298 = sshll.u32 [#allocation16], 4
      %s1299 = int_to_ptr.vmem [resolvable:$true] %s1298
      %1301 = dma.vmem_to_hbm [thread:$0]  %s1299, 1024, %s8, [#allocation10]
    $region65: #{tpu_custom_call.1} parent=1 // pred_fallthru
      _
    // Predicated region
    $region66: #{tpu_custom_call.1} parent=1 // pred_check
      _
    $region67: #{tpu_custom_call.1} parent=1 // pred_check_branch
      %1303 = sbr.rel (0) target = $region69
    $region68: #{tpu_custom_call.1} parent=1 // pred_region
      %s1305 = ssub.s32 128, 128
      %1306 = vsyncadd [#allocation18], %s1305
      %s1308 = sshll.u32 [#allocation17], 4
      %s1309 = int_to_ptr.vmem [resolvable:$true] %s1308
      %1311 = dma.vmem_to_hbm [thread:$0]  %s1309, 128, %s9, [#allocation18]
    $region69: #{tpu_custom_call.1} parent=1 // pred_fallthru
      _
    // Predicated region
    $region70: #{tpu_custom_call.1} parent=1 // pred_check
      _
    $region71: #{tpu_custom_call.1} parent=1 // pred_check_branch
      %1313 = sbr.rel (0) target = $region73
    $region72: #{tpu_custom_call.1} parent=1 // pred_region
      %s1315 = ssub.s32 128, 128
      %1316 = vsyncadd [#allocation18], %s1315
      %s1318 = sshll.u32 [#allocation19], 4
      %s1319 = int_to_ptr.vmem [resolvable:$true] %s1318
      %1321 = dma.vmem_to_hbm [thread:$0]  %s1319, 128, %s10, [#allocation18]
    $region73: #{tpu_custom_call.1} parent=1 // pred_fallthru
      _
    // Predicated region
    $region74: #{tpu_custom_call.1} parent=1 // pred_check
      _
    $region75: #{tpu_custom_call.1} parent=1 // pred_check_branch
      %1323 = sbr.rel (0) target = $region77
    $region76: #{tpu_custom_call.1} parent=1 // pred_region
      %1324 = dma.done [#allocation10], 1024
    $region77: #{tpu_custom_call.1} parent=1 // pred_fallthru
      _
    // Predicated region
    $region78: #{tpu_custom_call.1} parent=1 // pred_check
      _
    $region79: #{tpu_custom_call.1} parent=1 // pred_check_branch
      %1326 = sbr.rel (0) target = $region81
    $region80: #{tpu_custom_call.1} parent=1 // pred_region
      %1327 = dma.done [#allocation18], 128
    $region81: #{tpu_custom_call.1} parent=1 // pred_fallthru
      _
    // Predicated region
    $region82: #{tpu_custom_call.1} parent=1 // pred_check
      _
    $region83: #{tpu_custom_call.1} parent=1 // pred_check_branch
      %1329 = sbr.rel (0) target = $region85
    $region84: #{tpu_custom_call.1} parent=1 // pred_region
      %1330 = dma.done [#allocation18], 128
    $region85: #{tpu_custom_call.1} parent=1 // pred_fallthru
      _
    %1331 = vsyncpa [#allocation9], 1
    %1332 = vsyncpa [#allocation12], 1
    %1333 = vsyncpa [#allocation15], 1
    %1334 = vsyncpa [#allocation10], 1
    %1335 = vsyncpa [#allocation18], 1
  %1336 = vsyncmov [#allocation5]
  %s1337 = vpop.sfrf %1336
  %p1338 = scmp.eq.s32.totalorder %s1337, 0
  %p1339 = pneg %p1338
  %1341 = shalt.err (%p1339)
  %s1342 = scalar_lea.sflag [#allocation5], 1
  %1343 = vsyncmov %s1342
  %s1344 = vpop.sfrf %1343
  %p1345 = scmp.eq.s32.totalorder %s1344, 0
  %p1346 = pneg %p1345
  %1348 = shalt.err (%p1346)
  %s1349 = scalar_lea.sflag [#allocation5], 2
  %1350 = vsyncmov %s1349
  %s1351 = vpop.sfrf %1350
  %p1352 = scmp.eq.s32.totalorder %s1351, 0
  %p1353 = pneg %p1352
  %1355 = shalt.err (%p1353)
  %s1356 = scalar_lea.sflag [#allocation5], 3
  %1357 = vsyncmov %s1356
  %s1358 = vpop.sfrf %1357
  %p1359 = scmp.eq.s32.totalorder %s1358, 0
  %p1360 = pneg %p1359
  %1362 = shalt.err (%p1360)

</llo_original>
